<compile_context>
chip_gen: v7x
topology: tpu7x:2x2x1
jax: 0.10.0
libtpu: 0.0.40
codegen_flags: <defaults>
</compile_context>

<pallas_src>
from functools import partial

import jax
import jax.numpy as jnp
from jax import lax
from jax.experimental import pallas as pl
from jax.experimental.pallas import tpu as pltpu


def graph_gru_kernel(depth, N,
                     x_ref, gs_ref, h0_ref,
                     wx_ref, uw_ref, whh_ref,
                     bz_ref, bur_ref, bh_ref,
                     out_ref):
    M, H = out_ref.shape

    x = x_ref[...]          # (M, I)      bf16
    Gs = gs_ref[...]        # (N*M, M)    bf16 stacked one-hot gather matrix
    WxT = wx_ref[...]       # (I, 3H)     bf16  [Wzx^T | Wr^T | Whx^T]
    UrWzhT = uw_ref[...]    # (H, 2H)     bf16  [Ur^T | Wzh^T]
    WhhT = whh_ref[...]     # (H, H)      bf16
    bz = bz_ref[...]        # (1, H)      f32
    bur = bur_ref[...]      # (1, H)      f32
    bh = bh_ref[...]        # (1, H)      f32

    dot = lambda a, b: jnp.dot(a, b, preferred_element_type=jnp.float32)

    # ---- hoisted, loop-invariant work (one fused MXU op, biases folded) ----
    xproj = dot(x, WxT)                      # (M, 3H) f32
    xz = xproj[:, 0:H] + bz
    xr = xproj[:, H:2 * H] + bur
    xh = xproj[:, 2 * H:3 * H] + bh

    row_ids = lax.broadcasted_iota(jnp.int32, (M, H), 0)
    mask = (row_ids != 0).astype(jnp.float32)    # row 0 is the "null" message

    # ---- depth recurrence: 3 MXU matmuls per iteration ----
    def body(_, h):
        h_b = h.astype(jnp.bfloat16)

        # one matmul: proj = [h @ Ur^T | h @ Wzh^T]
        proj = dot(h_b, UrWzhT)                                    # (M, 2H) f32
        cat_in = jnp.concatenate(
            [h_b, proj.astype(jnp.bfloat16)], axis=1)              # (M, 3H) bf16

        # one gather matmul: row k*M+m selects message mess_graph[m, k]
        gath = dot(Gs, cat_in)                                     # (N*M, 3H) f32

        blk0 = gath[0:M, :]
        sum_h = blk0[:, 0:H]                                       # h_nei slot 0
        sum_hz = blk0[:, 2 * H:3 * H]                              # (h_nei @ Wzh^T) slot 0
        sum_gated = jax.nn.sigmoid(xr + blk0[:, H:2 * H]) * blk0[:, 0:H]
        for k in range(1, N):                                      # VPU adds only
            blk = gath[k * M:(k + 1) * M, :]
            h_nei_k = blk[:, 0:H]
            sum_h = sum_h + h_nei_k
            sum_hz = sum_hz + blk[:, 2 * H:3 * H]
            sum_gated = sum_gated + jax.nn.sigmoid(xr + blk[:, H:2 * H]) * h_nei_k

        z = jax.nn.sigmoid(xz + sum_hz)
        pre_h = jnp.tanh(xh + dot(sum_gated.astype(jnp.bfloat16), WhhT))

        h_new = (1.0 - z) * sum_h + z * pre_h
        return h_new * mask

    out_ref[...] = lax.fori_loop(0, depth, body, h0_ref[...], unroll=True)


def graph_gru_forward(h, x, mess_graph, params, depth):
    M, H = h.shape
    N = mess_graph.shape[1]
    I = x.shape[1]

    # Stacked one-hot gather matrix: row (k*M + m) selects h[mess_graph[m, k]].
    # 0/1 values are exact in bf16.
    Gs = jax.nn.one_hot(mess_graph.T.reshape(-1), M, dtype=jnp.bfloat16)   # (N*M, M)

    Wz, bz = params["W_z"], params["b_z"]          # (H, I+H), (H,)
    Wr = params["W_r"]                             # (H, I)
    Ur, bur = params["U_r"], params["b_ur"]        # (H, H), (H,)
    Wh, bh = params["W_h"], params["b_h"]          # (H, I+H), (H,)

    # Fused, pre-transposed weights.
    WxT = jnp.concatenate([Wz[:, :I].T, Wr.T, Wh[:, :I].T],
                          axis=1).astype(jnp.bfloat16)             # (I, 3H)
    UrWzhT = jnp.concatenate([Ur.T, Wz[:, I:].T],
                             axis=1).astype(jnp.bfloat16)          # (H, 2H)
    WhhT = Wh[:, I:].T.astype(jnp.bfloat16)                        # (H, H)

    args = [
        x.astype(jnp.bfloat16), Gs, h,
        WxT, UrWzhT, WhhT,
        bz.reshape(1, H), bur.reshape(1, H), bh.reshape(1, H),
    ]

    vmem = pl.BlockSpec(memory_space=pltpu.MemorySpace.VMEM)
    return pl.pallas_call(
        partial(graph_gru_kernel, depth, N),
        out_shape=jax.ShapeDtypeStruct((M, H), jnp.float32),
        in_specs=[vmem] * len(args),
        out_specs=vmem,
    )(*args)


def graph_gru_reference(h, x, mess_graph, params, depth):
    """Pure-JAX f32 reference replicating the PyTorch forward exactly."""
    M, H = h.shape
    mask = jnp.ones((M, 1), jnp.float32).at[0].set(0.0)
    Wz, bz = params["W_z"], params["b_z"]
    Wr = params["W_r"]
    Ur, bur = params["U_r"], params["b_ur"]
    Wh, bh = params["W_h"], params["b_h"]
    dot = partial(jnp.dot, precision=lax.Precision.HIGHEST)
    for _ in range(depth):
        h_nei = h[mess_graph]                               # (M, N, H)
        sum_h = h_nei.sum(axis=1)
        z = jax.nn.sigmoid(dot(jnp.concatenate([x, sum_h], axis=1), Wz.T) + bz)
        r1 = dot(x, Wr.T)[:, None, :]
        r2 = dot(h_nei, Ur.T) + bur
        r = jax.nn.sigmoid(r1 + r2)
        gated = r * h_nei
        sum_gated = gated.sum(axis=1)
        pre_h = jnp.tanh(dot(jnp.concatenate([x, sum_gated], axis=1), Wh.T) + bh)
        h = (1.0 - z) * sum_h + z * pre_h
        h = h * mask
    return h


if __name__ == "__main__":
    M, N, I, H, depth = 16, 4, 32, 32, 3   # messages, max neighbors, in, hidden, depth

    key = jax.random.PRNGKey(0)
    ks = jax.random.split(key, 10)

    params = {
        "W_z": 0.1 * jax.random.normal(ks[0], (H, I + H), jnp.float32),
        "b_z": 0.1 * jax.random.normal(ks[1], (H,), jnp.float32),
        "W_r": 0.1 * jax.random.normal(ks[2], (H, I), jnp.float32),
        "U_r": 0.1 * jax.random.normal(ks[3], (H, H), jnp.float32),
        "b_ur": 0.1 * jax.random.normal(ks[4], (H,), jnp.float32),
        "W_h": 0.1 * jax.random.normal(ks[5], (H, I + H), jnp.float32),
        "b_h": 0.1 * jax.random.normal(ks[6], (H,), jnp.float32),
    }

    h0 = jax.random.normal(ks[7], (M, H), jnp.float32)
    x = jax.random.normal(ks[8], (M, I), jnp.float32)
    mess_graph = jax.random.randint(ks[9], (M, N), 0, M, jnp.int32)

    out = graph_gru_forward(h0, x, mess_graph, params, depth)
    out = jax.block_until_ready(out)

    ref = graph_gru_reference(h0, x, mess_graph, params, depth)
    assert out.shape == (M, H)
    # Kernel uses bf16 MXU inputs with f32 accumulation, so compare against the
    # f32 reference with a bf16-appropriate tolerance.
    assert jnp.allclose(out, ref, rtol=3e-2, atol=3e-2), (
        f"max abs err = {jnp.max(jnp.abs(out - ref))}")

    print("KERNEL_OK")
</pallas_src>

<mosaic_0001>
module attributes {stable_mosaic.version = 11 : i64} {
  func.func @graph_gru_kernel(%arg0: memref<16x32xbf16, #tpu.memory_space<vmem>>, %arg1: memref<64x16xbf16, #tpu.memory_space<vmem>>, %arg2: memref<16x32xf32, #tpu.memory_space<vmem>>, %arg3: memref<32x96xbf16, #tpu.memory_space<vmem>>, %arg4: memref<32x64xbf16, #tpu.memory_space<vmem>>, %arg5: memref<32x32xbf16, #tpu.memory_space<vmem>>, %arg6: memref<1x32xf32, #tpu.memory_space<vmem>>, %arg7: memref<1x32xf32, #tpu.memory_space<vmem>>, %arg8: memref<1x32xf32, #tpu.memory_space<vmem>>, %arg9: memref<16x32xf32, #tpu.memory_space<vmem>>) attributes {dimension_semantics = [], scalar_prefetch = 0 : i64, scratch_operands = 0 : i64, tpu.core_type = #tpu.core_type<tc>} {
    %c0 = arith.constant 0 : index
    %c0_0 = arith.constant 0 : index
    %0 = vector.load %arg0[%c0, %c0_0] : memref<16x32xbf16, #tpu.memory_space<vmem>>, vector<16x32xbf16>
    %c0_1 = arith.constant 0 : index
    %c0_2 = arith.constant 0 : index
    %1 = vector.load %arg1[%c0_1, %c0_2] : memref<64x16xbf16, #tpu.memory_space<vmem>>, vector<64x16xbf16>
    %c0_3 = arith.constant 0 : index
    %c0_4 = arith.constant 0 : index
    %2 = vector.load %arg3[%c0_3, %c0_4] : memref<32x96xbf16, #tpu.memory_space<vmem>>, vector<32x96xbf16>
    %c0_5 = arith.constant 0 : index
    %c0_6 = arith.constant 0 : index
    %3 = vector.load %arg4[%c0_5, %c0_6] : memref<32x64xbf16, #tpu.memory_space<vmem>>, vector<32x64xbf16>
    %c0_7 = arith.constant 0 : index
    %c0_8 = arith.constant 0 : index
    %4 = vector.load %arg5[%c0_7, %c0_8] : memref<32x32xbf16, #tpu.memory_space<vmem>>, vector<32x32xbf16>
    %c0_9 = arith.constant 0 : index
    %c0_10 = arith.constant 0 : index
    %5 = vector.load %arg6[%c0_9, %c0_10] : memref<1x32xf32, #tpu.memory_space<vmem>>, vector<1x32xf32>
    %c0_11 = arith.constant 0 : index
    %c0_12 = arith.constant 0 : index
    %6 = vector.load %arg7[%c0_11, %c0_12] : memref<1x32xf32, #tpu.memory_space<vmem>>, vector<1x32xf32>
    %c0_13 = arith.constant 0 : index
    %c0_14 = arith.constant 0 : index
    %7 = vector.load %arg8[%c0_13, %c0_14] : memref<1x32xf32, #tpu.memory_space<vmem>>, vector<1x32xf32>
    %cst = arith.constant dense<0.000000e+00> : vector<16x96xf32>
    %8 = tpu.matmul %0, %2, %cst {dimension_numbers = #tpu.dot_dimension_numbers<[1], [0], [0], [1], [0, 0, 1, 1], [], []>} : vector<16x32xbf16>, vector<32x96xbf16>, vector<16x96xf32> -> vector<16x96xf32>
    %9 = vector.extract_strided_slice %8 {offsets = [0, 0], sizes = [16, 32], strides = [1, 1]} : vector<16x96xf32> to vector<16x32xf32>
    %10 = vector.broadcast %5 : vector<1x32xf32> to vector<16x32xf32>
    %11 = arith.addf %9, %10 : vector<16x32xf32>
    %12 = vector.extract_strided_slice %8 {offsets = [0, 32], sizes = [16, 32], strides = [1, 1]} : vector<16x96xf32> to vector<16x32xf32>
    %13 = vector.broadcast %6 : vector<1x32xf32> to vector<16x32xf32>
    %14 = arith.addf %12, %13 : vector<16x32xf32>
    %15 = vector.extract_strided_slice %8 {offsets = [0, 64], sizes = [16, 32], strides = [1, 1]} : vector<16x96xf32> to vector<16x32xf32>
    %16 = vector.broadcast %7 : vector<1x32xf32> to vector<16x32xf32>
    %17 = arith.addf %15, %16 : vector<16x32xf32>
    %18 = tpu.iota {dimensions = array<i32: 0>} : vector<16x32xi32>
    %c0_i32 = arith.constant 0 : i32
    %19 = vector.broadcast %c0_i32 : i32 to vector<16x32xi32>
    %20 = arith.cmpi ne, %18, %19 : vector<16x32xi32>
    %21 = arith.extui %20 : vector<16x32xi1> to vector<16x32xi32>
    %22 = arith.sitofp %21 : vector<16x32xi32> to vector<16x32xf32>
    %c0_15 = arith.constant 0 : index
    %c0_16 = arith.constant 0 : index
    %23 = vector.load %arg2[%c0_15, %c0_16] : memref<16x32xf32, #tpu.memory_space<vmem>>, vector<16x32xf32>
    %c0_i32_17 = arith.constant 0 : i32
    %24 = arith.truncf %23 : vector<16x32xf32> to vector<16x32xbf16>
    %cst_18 = arith.constant dense<0.000000e+00> : vector<16x64xf32>
    %25 = tpu.matmul %24, %3, %cst_18 {dimension_numbers = #tpu.dot_dimension_numbers<[1], [0], [0], [1], [0, 0, 1, 1], [], []>} : vector<16x32xbf16>, vector<32x64xbf16>, vector<16x64xf32> -> vector<16x64xf32>
    %26 = arith.truncf %25 : vector<16x64xf32> to vector<16x64xbf16>
    %27 = tpu.concatenate %24, %26 in 1 : vector<16x32xbf16>, vector<16x64xbf16> -> vector<16x96xbf16>
    %cst_19 = arith.constant dense<0.000000e+00> : vector<64x96xf32>
    %28 = tpu.matmul %1, %27, %cst_19 {dimension_numbers = #tpu.dot_dimension_numbers<[1], [0], [0], [1], [0, 0, 1, 1], [], []>} : vector<64x16xbf16>, vector<16x96xbf16>, vector<64x96xf32> -> vector<64x96xf32>
    %29 = vector.extract_strided_slice %28 {offsets = [0, 0], sizes = [16, 96], strides = [1, 1]} : vector<64x96xf32> to vector<16x96xf32>
    %30 = vector.extract_strided_slice %29 {offsets = [0, 0], sizes = [16, 32], strides = [1, 1]} : vector<16x96xf32> to vector<16x32xf32>
    %31 = vector.extract_strided_slice %29 {offsets = [0, 64], sizes = [16, 32], strides = [1, 1]} : vector<16x96xf32> to vector<16x32xf32>
    %32 = vector.extract_strided_slice %29 {offsets = [0, 32], sizes = [16, 32], strides = [1, 1]} : vector<16x96xf32> to vector<16x32xf32>
    %33 = arith.addf %14, %32 : vector<16x32xf32>
    %34 = arith.negf %33 : vector<16x32xf32>
    %35 = math.exp %34 : vector<16x32xf32>
    %cst_20 = arith.constant 1.000000e+00 : f32
    %36 = vector.broadcast %cst_20 : f32 to vector<16x32xf32>
    %37 = arith.addf %36, %35 : vector<16x32xf32>
    %38 = arith.divf %36, %37 : vector<16x32xf32>
    %39 = vector.extract_strided_slice %29 {offsets = [0, 0], sizes = [16, 32], strides = [1, 1]} : vector<16x96xf32> to vector<16x32xf32>
    %40 = arith.mulf %38, %39 : vector<16x32xf32>
    %41 = vector.extract_strided_slice %28 {offsets = [16, 0], sizes = [16, 96], strides = [1, 1]} : vector<64x96xf32> to vector<16x96xf32>
    %42 = vector.extract_strided_slice %41 {offsets = [0, 0], sizes = [16, 32], strides = [1, 1]} : vector<16x96xf32> to vector<16x32xf32>
    %43 = arith.addf %30, %42 : vector<16x32xf32>
    %44 = vector.extract_strided_slice %41 {offsets = [0, 64], sizes = [16, 32], strides = [1, 1]} : vector<16x96xf32> to vector<16x32xf32>
    %45 = arith.addf %31, %44 : vector<16x32xf32>
    %46 = vector.extract_strided_slice %41 {offsets = [0, 32], sizes = [16, 32], strides = [1, 1]} : vector<16x96xf32> to vector<16x32xf32>
    %47 = arith.addf %14, %46 : vector<16x32xf32>
    %48 = arith.negf %47 : vector<16x32xf32>
    %49 = math.exp %48 : vector<16x32xf32>
    %cst_21 = arith.constant 1.000000e+00 : f32
    %50 = vector.broadcast %cst_21 : f32 to vector<16x32xf32>
    %51 = arith.addf %50, %49 : vector<16x32xf32>
    %52 = arith.divf %50, %51 : vector<16x32xf32>
    %53 = arith.mulf %52, %42 : vector<16x32xf32>
    %54 = arith.addf %40, %53 : vector<16x32xf32>
    %55 = vector.extract_strided_slice %28 {offsets = [32, 0], sizes = [16, 96], strides = [1, 1]} : vector<64x96xf32> to vector<16x96xf32>
    %56 = vector.extract_strided_slice %55 {offsets = [0, 0], sizes = [16, 32], strides = [1, 1]} : vector<16x96xf32> to vector<16x32xf32>
    %57 = arith.addf %43, %56 : vector<16x32xf32>
    %58 = vector.extract_strided_slice %55 {offsets = [0, 64], sizes = [16, 32], strides = [1, 1]} : vector<16x96xf32> to vector<16x32xf32>
    %59 = arith.addf %45, %58 : vector<16x32xf32>
    %60 = vector.extract_strided_slice %55 {offsets = [0, 32], sizes = [16, 32], strides = [1, 1]} : vector<16x96xf32> to vector<16x32xf32>
    %61 = arith.addf %14, %60 : vector<16x32xf32>
    %62 = arith.negf %61 : vector<16x32xf32>
    %63 = math.exp %62 : vector<16x32xf32>
    %cst_22 = arith.constant 1.000000e+00 : f32
    %64 = vector.broadcast %cst_22 : f32 to vector<16x32xf32>
    %65 = arith.addf %64, %63 : vector<16x32xf32>
    %66 = arith.divf %64, %65 : vector<16x32xf32>
    %67 = arith.mulf %66, %56 : vector<16x32xf32>
    %68 = arith.addf %54, %67 : vector<16x32xf32>
    %69 = vector.extract_strided_slice %28 {offsets = [48, 0], sizes = [16, 96], strides = [1, 1]} : vector<64x96xf32> to vector<16x96xf32>
    %70 = vector.extract_strided_slice %69 {offsets = [0, 0], sizes = [16, 32], strides = [1, 1]} : vector<16x96xf32> to vector<16x32xf32>
    %71 = arith.addf %57, %70 : vector<16x32xf32>
    %72 = vector.extract_strided_slice %69 {offsets = [0, 64], sizes = [16, 32], strides = [1, 1]} : vector<16x96xf32> to vector<16x32xf32>
    %73 = arith.addf %59, %72 : vector<16x32xf32>
    %74 = vector.extract_strided_slice %69 {offsets = [0, 32], sizes = [16, 32], strides = [1, 1]} : vector<16x96xf32> to vector<16x32xf32>
    %75 = arith.addf %14, %74 : vector<16x32xf32>
    %76 = arith.negf %75 : vector<16x32xf32>
    %77 = math.exp %76 : vector<16x32xf32>
    %cst_23 = arith.constant 1.000000e+00 : f32
    %78 = vector.broadcast %cst_23 : f32 to vector<16x32xf32>
    %79 = arith.addf %78, %77 : vector<16x32xf32>
    %80 = arith.divf %78, %79 : vector<16x32xf32>
    %81 = arith.mulf %80, %70 : vector<16x32xf32>
    %82 = arith.addf %68, %81 : vector<16x32xf32>
    %83 = arith.addf %11, %73 : vector<16x32xf32>
    %84 = arith.negf %83 : vector<16x32xf32>
    %85 = math.exp %84 : vector<16x32xf32>
    %cst_24 = arith.constant 1.000000e+00 : f32
    %86 = vector.broadcast %cst_24 : f32 to vector<16x32xf32>
    %87 = arith.addf %86, %85 : vector<16x32xf32>
    %88 = arith.divf %86, %87 : vector<16x32xf32>
    %89 = arith.truncf %82 : vector<16x32xf32> to vector<16x32xbf16>
    %cst_25 = arith.constant dense<0.000000e+00> : vector<16x32xf32>
    %90 = tpu.matmul %89, %4, %cst_25 {dimension_numbers = #tpu.dot_dimension_numbers<[1], [0], [0], [1], [0, 0, 1, 1], [], []>} : vector<16x32xbf16>, vector<32x32xbf16>, vector<16x32xf32> -> vector<16x32xf32>
    %91 = arith.addf %17, %90 : vector<16x32xf32>
    %92 = math.tanh %91 : vector<16x32xf32>
    %cst_26 = arith.constant 1.000000e+00 : f32
    %93 = vector.broadcast %cst_26 : f32 to vector<16x32xf32>
    %94 = arith.subf %93, %88 : vector<16x32xf32>
    %95 = arith.mulf %94, %71 : vector<16x32xf32>
    %96 = arith.mulf %88, %92 : vector<16x32xf32>
    %97 = arith.addf %95, %96 : vector<16x32xf32>
    %98 = arith.mulf %97, %22 : vector<16x32xf32>
    %c1_i32 = arith.constant 1 : i32
    %99 = arith.truncf %98 : vector<16x32xf32> to vector<16x32xbf16>
    %cst_27 = arith.constant dense<0.000000e+00> : vector<16x64xf32>
    %100 = tpu.matmul %99, %3, %cst_27 {dimension_numbers = #tpu.dot_dimension_numbers<[1], [0], [0], [1], [0, 0, 1, 1], [], []>} : vector<16x32xbf16>, vector<32x64xbf16>, vector<16x64xf32> -> vector<16x64xf32>
    %101 = arith.truncf %100 : vector<16x64xf32> to vector<16x64xbf16>
    %102 = tpu.concatenate %99, %101 in 1 : vector<16x32xbf16>, vector<16x64xbf16> -> vector<16x96xbf16>
    %cst_28 = arith.constant dense<0.000000e+00> : vector<64x96xf32>
    %103 = tpu.matmul %1, %102, %cst_28 {dimension_numbers = #tpu.dot_dimension_numbers<[1], [0], [0], [1], [0, 0, 1, 1], [], []>} : vector<64x16xbf16>, vector<16x96xbf16>, vector<64x96xf32> -> vector<64x96xf32>
    %104 = vector.extract_strided_slice %103 {offsets = [0, 0], sizes = [16, 96], strides = [1, 1]} : vector<64x96xf32> to vector<16x96xf32>
    %105 = vector.extract_strided_slice %104 {offsets = [0, 0], sizes = [16, 32], strides = [1, 1]} : vector<16x96xf32> to vector<16x32xf32>
    %106 = vector.extract_strided_slice %104 {offsets = [0, 64], sizes = [16, 32], strides = [1, 1]} : vector<16x96xf32> to vector<16x32xf32>
    %107 = vector.extract_strided_slice %104 {offsets = [0, 32], sizes = [16, 32], strides = [1, 1]} : vector<16x96xf32> to vector<16x32xf32>
    %108 = arith.addf %14, %107 : vector<16x32xf32>
    %109 = arith.negf %108 : vector<16x32xf32>
    %110 = math.exp %109 : vector<16x32xf32>
    %cst_29 = arith.constant 1.000000e+00 : f32
    %111 = vector.broadcast %cst_29 : f32 to vector<16x32xf32>
    %112 = arith.addf %111, %110 : vector<16x32xf32>
    %113 = arith.divf %111, %112 : vector<16x32xf32>
    %114 = vector.extract_strided_slice %104 {offsets = [0, 0], sizes = [16, 32], strides = [1, 1]} : vector<16x96xf32> to vector<16x32xf32>
    %115 = arith.mulf %113, %114 : vector<16x32xf32>
    %116 = vector.extract_strided_slice %103 {offsets = [16, 0], sizes = [16, 96], strides = [1, 1]} : vector<64x96xf32> to vector<16x96xf32>
    %117 = vector.extract_strided_slice %116 {offsets = [0, 0], sizes = [16, 32], strides = [1, 1]} : vector<16x96xf32> to vector<16x32xf32>
    %118 = arith.addf %105, %117 : vector<16x32xf32>
    %119 = vector.extract_strided_slice %116 {offsets = [0, 64], sizes = [16, 32], strides = [1, 1]} : vector<16x96xf32> to vector<16x32xf32>
    %120 = arith.addf %106, %119 : vector<16x32xf32>
    %121 = vector.extract_strided_slice %116 {offsets = [0, 32], sizes = [16, 32], strides = [1, 1]} : vector<16x96xf32> to vector<16x32xf32>
    %122 = arith.addf %14, %121 : vector<16x32xf32>
    %123 = arith.negf %122 : vector<16x32xf32>
    %124 = math.exp %123 : vector<16x32xf32>
    %cst_30 = arith.constant 1.000000e+00 : f32
    %125 = vector.broadcast %cst_30 : f32 to vector<16x32xf32>
    %126 = arith.addf %125, %124 : vector<16x32xf32>
    %127 = arith.divf %125, %126 : vector<16x32xf32>
    %128 = arith.mulf %127, %117 : vector<16x32xf32>
    %129 = arith.addf %115, %128 : vector<16x32xf32>
    %130 = vector.extract_strided_slice %103 {offsets = [32, 0], sizes = [16, 96], strides = [1, 1]} : vector<64x96xf32> to vector<16x96xf32>
    %131 = vector.extract_strided_slice %130 {offsets = [0, 0], sizes = [16, 32], strides = [1, 1]} : vector<16x96xf32> to vector<16x32xf32>
    %132 = arith.addf %118, %131 : vector<16x32xf32>
    %133 = vector.extract_strided_slice %130 {offsets = [0, 64], sizes = [16, 32], strides = [1, 1]} : vector<16x96xf32> to vector<16x32xf32>
    %134 = arith.addf %120, %133 : vector<16x32xf32>
    %135 = vector.extract_strided_slice %130 {offsets = [0, 32], sizes = [16, 32], strides = [1, 1]} : vector<16x96xf32> to vector<16x32xf32>
    %136 = arith.addf %14, %135 : vector<16x32xf32>
    %137 = arith.negf %136 : vector<16x32xf32>
    %138 = math.exp %137 : vector<16x32xf32>
    %cst_31 = arith.constant 1.000000e+00 : f32
    %139 = vector.broadcast %cst_31 : f32 to vector<16x32xf32>
    %140 = arith.addf %139, %138 : vector<16x32xf32>
    %141 = arith.divf %139, %140 : vector<16x32xf32>
    %142 = arith.mulf %141, %131 : vector<16x32xf32>
    %143 = arith.addf %129, %142 : vector<16x32xf32>
    %144 = vector.extract_strided_slice %103 {offsets = [48, 0], sizes = [16, 96], strides = [1, 1]} : vector<64x96xf32> to vector<16x96xf32>
    %145 = vector.extract_strided_slice %144 {offsets = [0, 0], sizes = [16, 32], strides = [1, 1]} : vector<16x96xf32> to vector<16x32xf32>
    %146 = arith.addf %132, %145 : vector<16x32xf32>
    %147 = vector.extract_strided_slice %144 {offsets = [0, 64], sizes = [16, 32], strides = [1, 1]} : vector<16x96xf32> to vector<16x32xf32>
    %148 = arith.addf %134, %147 : vector<16x32xf32>
    %149 = vector.extract_strided_slice %144 {offsets = [0, 32], sizes = [16, 32], strides = [1, 1]} : vector<16x96xf32> to vector<16x32xf32>
    %150 = arith.addf %14, %149 : vector<16x32xf32>
    %151 = arith.negf %150 : vector<16x32xf32>
    %152 = math.exp %151 : vector<16x32xf32>
    %cst_32 = arith.constant 1.000000e+00 : f32
    %153 = vector.broadcast %cst_32 : f32 to vector<16x32xf32>
    %154 = arith.addf %153, %152 : vector<16x32xf32>
    %155 = arith.divf %153, %154 : vector<16x32xf32>
    %156 = arith.mulf %155, %145 : vector<16x32xf32>
    %157 = arith.addf %143, %156 : vector<16x32xf32>
    %158 = arith.addf %11, %148 : vector<16x32xf32>
    %159 = arith.negf %158 : vector<16x32xf32>
    %160 = math.exp %159 : vector<16x32xf32>
    %cst_33 = arith.constant 1.000000e+00 : f32
    %161 = vector.broadcast %cst_33 : f32 to vector<16x32xf32>
    %162 = arith.addf %161, %160 : vector<16x32xf32>
    %163 = arith.divf %161, %162 : vector<16x32xf32>
    %164 = arith.truncf %157 : vector<16x32xf32> to vector<16x32xbf16>
    %cst_34 = arith.constant dense<0.000000e+00> : vector<16x32xf32>
    %165 = tpu.matmul %164, %4, %cst_34 {dimension_numbers = #tpu.dot_dimension_numbers<[1], [0], [0], [1], [0, 0, 1, 1], [], []>} : vector<16x32xbf16>, vector<32x32xbf16>, vector<16x32xf32> -> vector<16x32xf32>
    %166 = arith.addf %17, %165 : vector<16x32xf32>
    %167 = math.tanh %166 : vector<16x32xf32>
    %cst_35 = arith.constant 1.000000e+00 : f32
    %168 = vector.broadcast %cst_35 : f32 to vector<16x32xf32>
    %169 = arith.subf %168, %163 : vector<16x32xf32>
    %170 = arith.mulf %169, %146 : vector<16x32xf32>
    %171 = arith.mulf %163, %167 : vector<16x32xf32>
    %172 = arith.addf %170, %171 : vector<16x32xf32>
    %173 = arith.mulf %172, %22 : vector<16x32xf32>
    %c2_i32 = arith.constant 2 : i32
    %174 = arith.truncf %173 : vector<16x32xf32> to vector<16x32xbf16>
    %cst_36 = arith.constant dense<0.000000e+00> : vector<16x64xf32>
    %175 = tpu.matmul %174, %3, %cst_36 {dimension_numbers = #tpu.dot_dimension_numbers<[1], [0], [0], [1], [0, 0, 1, 1], [], []>} : vector<16x32xbf16>, vector<32x64xbf16>, vector<16x64xf32> -> vector<16x64xf32>
    %176 = arith.truncf %175 : vector<16x64xf32> to vector<16x64xbf16>
    %177 = tpu.concatenate %174, %176 in 1 : vector<16x32xbf16>, vector<16x64xbf16> -> vector<16x96xbf16>
    %cst_37 = arith.constant dense<0.000000e+00> : vector<64x96xf32>
    %178 = tpu.matmul %1, %177, %cst_37 {dimension_numbers = #tpu.dot_dimension_numbers<[1], [0], [0], [1], [0, 0, 1, 1], [], []>} : vector<64x16xbf16>, vector<16x96xbf16>, vector<64x96xf32> -> vector<64x96xf32>
    %179 = vector.extract_strided_slice %178 {offsets = [0, 0], sizes = [16, 96], strides = [1, 1]} : vector<64x96xf32> to vector<16x96xf32>
    %180 = vector.extract_strided_slice %179 {offsets = [0, 0], sizes = [16, 32], strides = [1, 1]} : vector<16x96xf32> to vector<16x32xf32>
    %181 = vector.extract_strided_slice %179 {offsets = [0, 64], sizes = [16, 32], strides = [1, 1]} : vector<16x96xf32> to vector<16x32xf32>
    %182 = vector.extract_strided_slice %179 {offsets = [0, 32], sizes = [16, 32], strides = [1, 1]} : vector<16x96xf32> to vector<16x32xf32>
    %183 = arith.addf %14, %182 : vector<16x32xf32>
    %184 = arith.negf %183 : vector<16x32xf32>
    %185 = math.exp %184 : vector<16x32xf32>
    %cst_38 = arith.constant 1.000000e+00 : f32
    %186 = vector.broadcast %cst_38 : f32 to vector<16x32xf32>
    %187 = arith.addf %186, %185 : vector<16x32xf32>
    %188 = arith.divf %186, %187 : vector<16x32xf32>
    %189 = vector.extract_strided_slice %179 {offsets = [0, 0], sizes = [16, 32], strides = [1, 1]} : vector<16x96xf32> to vector<16x32xf32>
    %190 = arith.mulf %188, %189 : vector<16x32xf32>
    %191 = vector.extract_strided_slice %178 {offsets = [16, 0], sizes = [16, 96], strides = [1, 1]} : vector<64x96xf32> to vector<16x96xf32>
    %192 = vector.extract_strided_slice %191 {offsets = [0, 0], sizes = [16, 32], strides = [1, 1]} : vector<16x96xf32> to vector<16x32xf32>
    %193 = arith.addf %180, %192 : vector<16x32xf32>
    %194 = vector.extract_strided_slice %191 {offsets = [0, 64], sizes = [16, 32], strides = [1, 1]} : vector<16x96xf32> to vector<16x32xf32>
    %195 = arith.addf %181, %194 : vector<16x32xf32>
    %196 = vector.extract_strided_slice %191 {offsets = [0, 32], sizes = [16, 32], strides = [1, 1]} : vector<16x96xf32> to vector<16x32xf32>
    %197 = arith.addf %14, %196 : vector<16x32xf32>
    %198 = arith.negf %197 : vector<16x32xf32>
    %199 = math.exp %198 : vector<16x32xf32>
    %cst_39 = arith.constant 1.000000e+00 : f32
    %200 = vector.broadcast %cst_39 : f32 to vector<16x32xf32>
    %201 = arith.addf %200, %199 : vector<16x32xf32>
    %202 = arith.divf %200, %201 : vector<16x32xf32>
    %203 = arith.mulf %202, %192 : vector<16x32xf32>
    %204 = arith.addf %190, %203 : vector<16x32xf32>
    %205 = vector.extract_strided_slice %178 {offsets = [32, 0], sizes = [16, 96], strides = [1, 1]} : vector<64x96xf32> to vector<16x96xf32>
    %206 = vector.extract_strided_slice %205 {offsets = [0, 0], sizes = [16, 32], strides = [1, 1]} : vector<16x96xf32> to vector<16x32xf32>
    %207 = arith.addf %193, %206 : vector<16x32xf32>
    %208 = vector.extract_strided_slice %205 {offsets = [0, 64], sizes = [16, 32], strides = [1, 1]} : vector<16x96xf32> to vector<16x32xf32>
    %209 = arith.addf %195, %208 : vector<16x32xf32>
    %210 = vector.extract_strided_slice %205 {offsets = [0, 32], sizes = [16, 32], strides = [1, 1]} : vector<16x96xf32> to vector<16x32xf32>
    %211 = arith.addf %14, %210 : vector<16x32xf32>
    %212 = arith.negf %211 : vector<16x32xf32>
    %213 = math.exp %212 : vector<16x32xf32>
    %cst_40 = arith.constant 1.000000e+00 : f32
    %214 = vector.broadcast %cst_40 : f32 to vector<16x32xf32>
    %215 = arith.addf %214, %213 : vector<16x32xf32>
    %216 = arith.divf %214, %215 : vector<16x32xf32>
    %217 = arith.mulf %216, %206 : vector<16x32xf32>
    %218 = arith.addf %204, %217 : vector<16x32xf32>
    %219 = vector.extract_strided_slice %178 {offsets = [48, 0], sizes = [16, 96], strides = [1, 1]} : vector<64x96xf32> to vector<16x96xf32>
    %220 = vector.extract_strided_slice %219 {offsets = [0, 0], sizes = [16, 32], strides = [1, 1]} : vector<16x96xf32> to vector<16x32xf32>
    %221 = arith.addf %207, %220 : vector<16x32xf32>
    %222 = vector.extract_strided_slice %219 {offsets = [0, 64], sizes = [16, 32], strides = [1, 1]} : vector<16x96xf32> to vector<16x32xf32>
    %223 = arith.addf %209, %222 : vector<16x32xf32>
    %224 = vector.extract_strided_slice %219 {offsets = [0, 32], sizes = [16, 32], strides = [1, 1]} : vector<16x96xf32> to vector<16x32xf32>
    %225 = arith.addf %14, %224 : vector<16x32xf32>
    %226 = arith.negf %225 : vector<16x32xf32>
    %227 = math.exp %226 : vector<16x32xf32>
    %cst_41 = arith.constant 1.000000e+00 : f32
    %228 = vector.broadcast %cst_41 : f32 to vector<16x32xf32>
    %229 = arith.addf %228, %227 : vector<16x32xf32>
    %230 = arith.divf %228, %229 : vector<16x32xf32>
    %231 = arith.mulf %230, %220 : vector<16x32xf32>
    %232 = arith.addf %218, %231 : vector<16x32xf32>
    %233 = arith.addf %11, %223 : vector<16x32xf32>
    %234 = arith.negf %233 : vector<16x32xf32>
    %235 = math.exp %234 : vector<16x32xf32>
    %cst_42 = arith.constant 1.000000e+00 : f32
    %236 = vector.broadcast %cst_42 : f32 to vector<16x32xf32>
    %237 = arith.addf %236, %235 : vector<16x32xf32>
    %238 = arith.divf %236, %237 : vector<16x32xf32>
    %239 = arith.truncf %232 : vector<16x32xf32> to vector<16x32xbf16>
    %cst_43 = arith.constant dense<0.000000e+00> : vector<16x32xf32>
    %240 = tpu.matmul %239, %4, %cst_43 {dimension_numbers = #tpu.dot_dimension_numbers<[1], [0], [0], [1], [0, 0, 1, 1], [], []>} : vector<16x32xbf16>, vector<32x32xbf16>, vector<16x32xf32> -> vector<16x32xf32>
    %241 = arith.addf %17, %240 : vector<16x32xf32>
    %242 = math.tanh %241 : vector<16x32xf32>
    %cst_44 = arith.constant 1.000000e+00 : f32
    %243 = vector.broadcast %cst_44 : f32 to vector<16x32xf32>
    %244 = arith.subf %243, %238 : vector<16x32xf32>
    %245 = arith.mulf %244, %221 : vector<16x32xf32>
    %246 = arith.mulf %238, %242 : vector<16x32xf32>
    %247 = arith.addf %245, %246 : vector<16x32xf32>
    %248 = arith.mulf %247, %22 : vector<16x32xf32>
    %c0_45 = arith.constant 0 : index
    %c0_46 = arith.constant 0 : index
    %249 = vector.load %arg9[%c0_45, %c0_46] : memref<16x32xf32, #tpu.memory_space<vmem>>, vector<16x32xf32>
    tpu.vector_store %arg9[%c0_45, %c0_46], %248 {strides = array<i32>} : memref<16x32xf32, #tpu.memory_space<vmem>>, vector<16x32xf32>,
    return
  }
}

</mosaic_0001>

<llo_original>
// kernel: tpu_custom_call.1
$region0: #{tpu_custom_call.1}
  #allocation0 [shape = 'u32[]', space=smem, size = 0x4, offset = 0x4, fixed_abs, tag = 'smem constant byte address 0x4 - core index']
  #allocation1 [shape = 'u32[144,128]{1,0:T(1,128)}', space=vmem, size = 0x12000, scoped, tag = 'internal scratch']
  %s0 = inlined_call_operand.hbm [shape: bf16[16,32], index: 0, kind: input, shape index: {}]
  %s1 = inlined_call_operand.vmem [shape: bf16[64,16], index: 1, kind: input, shape index: {}]
  %s2 = inlined_call_operand.vmem [shape: f32[16,32], index: 2, kind: input, shape index: {}]
  %s3 = inlined_call_operand.vmem [shape: bf16[32,96], index: 3, kind: input, shape index: {}]
  %s4 = inlined_call_operand.vmem [shape: bf16[32,64], index: 4, kind: input, shape index: {}]
  %s5 = inlined_call_operand.hbm [shape: bf16[32,32], index: 5, kind: input, shape index: {}]
  %s6 = inlined_call_operand.vmem [shape: f32[1,32], index: 6, kind: input, shape index: {}]
  %s7 = inlined_call_operand.vmem [shape: f32[1,32], index: 7, kind: input, shape index: {}]
  %s8 = inlined_call_operand.vmem [shape: f32[1,32], index: 8, kind: input, shape index: {}]
  %s9 = inlined_call_operand.hbm [shape: f32[16,32], index: 9, kind: output, shape index: {}]
  %s10 = sld [smem:[#allocation0]]
  $region54: #{tpu_custom_call.1} parent=0
    _
  %s12 = ssub.s32 1, %s10
  %s13 = scalar_select 0, %s12, %s10
  $region1: #{tpu_custom_call.1} parent=0
    #allocation2 [shape = 'u8[4096]{0}', space=vmem, size = 0x1000, scoped, tag = 'input window, operand 0, single buffered']
    #allocation3 [shape = 's32[1]{0}', space=sflag, size = 0x4, scoped, tag = 'scoped memory for tpu_custom_call.1']
    #allocation4 [shape = 's32[1]{0}', space=sflag, size = 0x4, scoped, tag = 'scoped memory for tpu_custom_call.1']
    #allocation5 [shape = 'u8[8192]{0}', space=vmem, size = 0x2000, scoped, tag = 'input window, operand 5, single buffered']
    #allocation6 [shape = 's32[1]{0}', space=sflag, size = 0x4, scoped, tag = 'scoped memory for tpu_custom_call.1']
    #allocation7 [shape = 'u8[8192]{0}', space=vmem, size = 0x2000, scoped, tag = 'output window, operand 0, single buffered']
    %14 = vsyncpa [#allocation3], 0
    %15 = vsyncpa [#allocation6], 0
    %16 = vsyncpa [#allocation4], 0
    // Predicated region
    $region2: #{tpu_custom_call.1} parent=1 // pred_check
      _
    $region3: #{tpu_custom_call.1} parent=1 // pred_check_branch
      %18 = sbr.rel (0) target = $region5
    $region4: #{tpu_custom_call.1} parent=1 // pred_region
      %s20 = ssub.s32 128, 128
      %21 = vsyncadd [#allocation3], %s20
      %s22 = sshll.u32 [#allocation2], 4
      %s23 = int_to_ptr.vmem [resolvable:$true] %s22
      %28 = dma.hbm_to_vmem [thread:$0]  %s0, 128, %s23, [#allocation3], 64, 64, 4
    $region5: #{tpu_custom_call.1} parent=1 // pred_fallthru
      _
    // Predicated region
    $region6: #{tpu_custom_call.1} parent=1 // pred_check
      _
    $region7: #{tpu_custom_call.1} parent=1 // pred_check_branch
      %30 = sbr.rel (0) target = $region9
    $region8: #{tpu_custom_call.1} parent=1 // pred_region
      _
    $region9: #{tpu_custom_call.1} parent=1 // pred_fallthru
      _
    // Predicated region
    $region10: #{tpu_custom_call.1} parent=1 // pred_check
      _
    $region11: #{tpu_custom_call.1} parent=1 // pred_check_branch
      %32 = sbr.rel (0) target = $region13
    $region12: #{tpu_custom_call.1} parent=1 // pred_region
      _
    $region13: #{tpu_custom_call.1} parent=1 // pred_fallthru
      _
    // Predicated region
    $region14: #{tpu_custom_call.1} parent=1 // pred_check
      _
    $region15: #{tpu_custom_call.1} parent=1 // pred_check_branch
      %34 = sbr.rel (0) target = $region17
    $region16: #{tpu_custom_call.1} parent=1 // pred_region
      _
    $region17: #{tpu_custom_call.1} parent=1 // pred_fallthru
      _
    // Predicated region
    $region18: #{tpu_custom_call.1} parent=1 // pred_check
      _
    $region19: #{tpu_custom_call.1} parent=1 // pred_check_branch
      %36 = sbr.rel (0) target = $region21
    $region20: #{tpu_custom_call.1} parent=1 // pred_region
      _
    $region21: #{tpu_custom_call.1} parent=1 // pred_fallthru
      _
    // Predicated region
    $region22: #{tpu_custom_call.1} parent=1 // pred_check
      _
    $region23: #{tpu_custom_call.1} parent=1 // pred_check_branch
      %38 = sbr.rel (0) target = $region25
    $region24: #{tpu_custom_call.1} parent=1 // pred_region
      %s40 = ssub.s32 256, 256
      %41 = vsyncadd [#allocation6], %s40
      %s42 = sshll.u32 [#allocation5], 4
      %s43 = int_to_ptr.vmem [resolvable:$true] %s42
      %48 = dma.hbm_to_vmem [thread:$0]  %s5, 256, %s43, [#allocation6], 64, 64, 4
    $region25: #{tpu_custom_call.1} parent=1 // pred_fallthru
      _
    // Predicated region
    $region26: #{tpu_custom_call.1} parent=1 // pred_check
      _
    $region27: #{tpu_custom_call.1} parent=1 // pred_check_branch
      %50 = sbr.rel (0) target = $region29
    $region28: #{tpu_custom_call.1} parent=1 // pred_region
      _
    $region29: #{tpu_custom_call.1} parent=1 // pred_fallthru
      _
    // Predicated region
    $region30: #{tpu_custom_call.1} parent=1 // pred_check
      _
    $region31: #{tpu_custom_call.1} parent=1 // pred_check_branch
      %52 = sbr.rel (0) target = $region33
    $region32: #{tpu_custom_call.1} parent=1 // pred_region
      _
    $region33: #{tpu_custom_call.1} parent=1 // pred_fallthru
      _
    // Predicated region
    $region34: #{tpu_custom_call.1} parent=1 // pred_check
      _
    $region35: #{tpu_custom_call.1} parent=1 // pred_check_branch
      %54 = sbr.rel (0) target = $region37
    $region36: #{tpu_custom_call.1} parent=1 // pred_region
      _
    $region37: #{tpu_custom_call.1} parent=1 // pred_fallthru
      _
    // Predicated region
    $region38: #{tpu_custom_call.1} parent=1 // pred_check
      _
    $region39: #{tpu_custom_call.1} parent=1 // pred_check_branch
      %56 = sbr.rel (0) target = $region41
    $region40: #{tpu_custom_call.1} parent=1 // pred_region
      %57 = dma.done [#allocation3], 128
    $region41: #{tpu_custom_call.1} parent=1 // pred_fallthru
      _
    // Predicated region
    $region42: #{tpu_custom_call.1} parent=1 // pred_check
      _
    $region43: #{tpu_custom_call.1} parent=1 // pred_check_branch
      %59 = sbr.rel (0) target = $region45
    $region44: #{tpu_custom_call.1} parent=1 // pred_region
      %60 = dma.done [#allocation6], 256
    $region45: #{tpu_custom_call.1} parent=1 // pred_fallthru
      _
    %v62 = vld [vmem:[#allocation2] sm:$0xf]
    %v63 = vld [vmem:[#allocation2 + $0x4] sm:$0xf]
    %v64 = vld [vmem:[%s1] sm:$0xf]
    %v65 = vld [vmem:[%s1 + $0x4] sm:$0xf]
    %v66 = vld [vmem:[%s1 + $0x8] sm:$0xf]
    %v67 = vld [vmem:[%s1 + $0xc] sm:$0xf]
    %v68 = vld [vmem:[%s1 + $0x10] sm:$0xf]
    %v69 = vld [vmem:[%s1 + $0x14] sm:$0xf]
    %v70 = vld [vmem:[%s1 + $0x18] sm:$0xf]
    %v71 = vld [vmem:[%s1 + $0x1c] sm:$0xf]
    %v72 = vld [vmem:[%s3] sm:$0xf]
    %v73 = vld [vmem:[%s3 + $0x4] sm:$0xf]
    %v74 = vld [vmem:[%s3 + $0x8] sm:$0xf]
    %v75 = vld [vmem:[%s3 + $0xc] sm:$0xf]
    %v76 = vld [vmem:[%s4] sm:$0xf]
    %v77 = vld [vmem:[%s4 + $0x4] sm:$0xf]
    %v78 = vld [vmem:[%s4 + $0x8] sm:$0xf]
    %v79 = vld [vmem:[%s4 + $0xc] sm:$0xf]
    %v80 = vld [vmem:[#allocation5] sm:$0xf]
    %v81 = vld [vmem:[#allocation5 + $0x4] sm:$0xf]
    %v82 = vld [vmem:[#allocation5 + $0x8] sm:$0xf]
    %v83 = vld [vmem:[#allocation5 + $0xc] sm:$0xf]
    %v84 = vld [vmem:[%s6] sm:$0x1]
    %v85 = vld [vmem:[%s7] sm:$0x1]
    %v86 = vld [vmem:[%s8] sm:$0x1]
    %v89 = vunpack.c.l.b16 %v62
    %v90 = vunpack.c.l.b16 %v63
    %v91 = vpack.c.b16 %v90, %v89
    %v96 = vunpack.c.l.b16 %v72
    %v97 = vunpack.c.l.b16 %v73
    %v98 = vunpack.c.l.b16 %v74
    %v99 = vunpack.c.l.b16 %v75
    %v100 = vpack.c.b16 %v97, %v96
    %v101 = vpack.c.b16 %v99, %v98
    %vm104 = vcmask 261120
    %v106 = vsel %vm104, %v91, 0
    %108 = vmatprep.subr.bf16.mxu0 0
    %109 = vmatpush1.bf16.msra.mxu0 %v100
    %110 = vmatprep.subr.bf16.mxu0 0
    %111 = vmatpush1.bf16.msra.mxu0 %v101
    %112 = vmatprep.subr.bf16.mxu0 0
    %113 = vmatpush1.bf16.msra.mxu0 0
    %114 = vmatprep.subr.bf16.mxu0 0
    %115 = vmatpush1.bf16.msra.mxu0 0
    %116 = vmatprep.subr.bf16.mxu0 0
    %117 = vmatpush1.bf16.msra.mxu0 0
    %118 = vmatprep.subr.bf16.mxu0 0
    %119 = vmatpush1.bf16.msra.mxu0 0
    %120 = vmatprep.subr.bf16.mxu0 0
    %121 = vmatpush1.bf16.msra.mxu0 0
    %122 = vmatprep.subr.bf16.mxu0 0
    %123 = vmatpush1.bf16.msra.mxu0 0
    %124 = vmatprep.subr.bf16.mxu0 0
    %125 = vmatpush1.bf16.msra.mxu0 0
    %126 = vmatprep.subr.bf16.mxu0 0
    %127 = vmatpush1.bf16.msra.mxu0 0
    %128 = vmatprep.subr.bf16.mxu0 0
    %129 = vmatpush1.bf16.msra.mxu0 0
    %130 = vmatprep.subr.bf16.mxu0 0
    %131 = vmatpush1.bf16.msra.mxu0 0
    %132 = vmatprep.subr.bf16.mxu0 0
    %133 = vmatpush1.bf16.msra.mxu0 0
    %134 = vmatprep.subr.bf16.mxu0 0
    %135 = vmatpush1.bf16.msra.mxu0 0
    %136 = vmatprep.subr.bf16.mxu0 0
    %137 = vmatpush1.bf16.msra.mxu0 0
    %138 = vmatprep.subr.bf16.mxu0 0
    %139 = vmatpush1.bf16.msra.mxu0 0
    %140 = vmatprep.mubr.bf16.mxu0 0
    %141 = vmatmul.mubr.bf16.gmra.mrb[0].mxu0 %v106
    %v142 = vpop.f32.mrb[0].mxu0
    %v143 = vadd.f32 0.0, %v142
    %v144 = vpop.f32.mrb[0].mxu0
    %v145 = vpop.f32.mrb[0].mxu0
    %v146 = vadd.f32 0.0, %v145
    %v147 = vpop.f32.mrb[0].mxu0
    %148 = vdwg.mxu0
    %v150 = vlaneseq
    %v151 = vshrl.u32 %v150, 7
    %v152 = vsub.s32 0, %v151
    %v153 = vrot.slane %v84, %v152
    %v155 = vadd.f32 %v143, %v153
    %v156 = vadd.f32 %v146, %v153
    %v158 = vlaneseq
    %v159 = vshrl.u32 %v158, 7
    %v160 = vsub.s32 0, %v159
    %v161 = vrot.slane %v85, %v160
    %162 = vrot.lane.b32.xlu0 %v161, 32
    %v163 = vpop.permute.xlu0 %162
    %v165 = vadd.f32 %v143, %v163
    %v166 = vadd.f32 %v146, %v163
    %v168 = vlaneseq
    %v169 = vshrl.u32 %v168, 7
    %v170 = vsub.s32 0, %v169
    %v171 = vrot.slane %v86, %v170
    %172 = vrot.lane.b32.xlu0 %v171, 64
    %v173 = vpop.permute.xlu0 %172
    %v175 = vadd.f32 %v143, %v173
    %v176 = vadd.f32 %v146, %v173
    %v177 = vlaneseq
    %v178 = vshrl.u32 %v177, 7
    %v179 = vadd.s32 %v178, 8
    %vm180 = vcmp.ne.s32.totalorder %v178, 0
    %vm181 = vcmp.ne.s32.totalorder %v179, 0
    %v182 = vsel %vm180, 1, 0
    %v183 = vsel %vm181, 1, 0
    %v184 = vcvt.s32.f32 %v182
    %v185 = vcvt.s32.f32 %v183
    %v186 = vld [vmem:[%s2] sm:$0xff]
    %v187 = vld [vmem:[%s2 + $0x8] sm:$0xff]
    %v188 = vpack.c.bf16 %v187, %v186
    %v193 = vunpack.c.l.b16 %v76
    %v194 = vunpack.c.l.b16 %v77
    %v195 = vunpack.c.l.b16 %v78
    %v196 = vunpack.c.l.b16 %v79
    %v197 = vpack.c.b16 %v194, %v193
    %v198 = vpack.c.b16 %v196, %v195
    %v202 = vsel %vm104, %v188, 0
    %204 = vmatprep.subr.bf16.mxu0 0
    %205 = vmatpush1.bf16.msra.mxu0 %v197
    %206 = vmatprep.subr.bf16.mxu0 0
    %207 = vmatpush1.bf16.msra.mxu0 %v198
    %208 = vmatprep.subr.bf16.mxu0 0
    %209 = vmatpush1.bf16.msra.mxu0 0
    %210 = vmatprep.subr.bf16.mxu0 0
    %211 = vmatpush1.bf16.msra.mxu0 0
    %212 = vmatprep.subr.bf16.mxu0 0
    %213 = vmatpush1.bf16.msra.mxu0 0
    %214 = vmatprep.subr.bf16.mxu0 0
    %215 = vmatpush1.bf16.msra.mxu0 0
    %216 = vmatprep.subr.bf16.mxu0 0
    %217 = vmatpush1.bf16.msra.mxu0 0
    %218 = vmatprep.subr.bf16.mxu0 0
    %219 = vmatpush1.bf16.msra.mxu0 0
    %220 = vmatprep.subr.bf16.mxu0 0
    %221 = vmatpush1.bf16.msra.mxu0 0
    %222 = vmatprep.subr.bf16.mxu0 0
    %223 = vmatpush1.bf16.msra.mxu0 0
    %224 = vmatprep.subr.bf16.mxu0 0
    %225 = vmatpush1.bf16.msra.mxu0 0
    %226 = vmatprep.subr.bf16.mxu0 0
    %227 = vmatpush1.bf16.msra.mxu0 0
    %228 = vmatprep.subr.bf16.mxu0 0
    %229 = vmatpush1.bf16.msra.mxu0 0
    %230 = vmatprep.subr.bf16.mxu0 0
    %231 = vmatpush1.bf16.msra.mxu0 0
    %232 = vmatprep.subr.bf16.mxu0 0
    %233 = vmatpush1.bf16.msra.mxu0 0
    %234 = vmatprep.subr.bf16.mxu0 0
    %235 = vmatpush1.bf16.msra.mxu0 0
    %236 = vmatprep.mubr.bf16.mxu0 0
    %237 = vmatmul.mubr.bf16.gmra.mrb[0].mxu0 %v202
    %v238 = vpop.f32.mrb[0].mxu0
    %v239 = vadd.f32 0.0, %v238
    %v240 = vpop.f32.mrb[0].mxu0
    %v241 = vpop.f32.mrb[0].mxu0
    %v242 = vadd.f32 0.0, %v241
    %v243 = vpop.f32.mrb[0].mxu0
    %244 = vdwg.mxu0
    %v245 = vpack.c.bf16 %v242, %v239
    %247 = vrot.lane.b32.xlu0 %v245, 32
    %v248 = vpop.permute.xlu0 %247
    %v250 = vsel %vm104, %v188, %v248
    %v260 = vunpack.c.l.b16 %v64
    %v261 = vunpack.c.l.b16 %v65
    %v262 = vunpack.c.l.b16 %v66
    %v263 = vunpack.c.l.b16 %v67
    %v264 = vunpack.c.l.b16 %v68
    %v265 = vunpack.c.l.b16 %v69
    %v266 = vunpack.c.l.b16 %v70
    %v267 = vunpack.c.l.b16 %v71
    %v268 = vpack.c.b16 %v261, %v260
    %v269 = vpack.c.b16 %v263, %v262
    %v270 = vpack.c.b16 %v265, %v264
    %v271 = vpack.c.b16 %v267, %v266
    %vm272 = vcmask 130048
    %v274 = vsel %vm272, %v268, 0
    %v277 = vsel %vm272, %v269, 0
    %v280 = vsel %vm272, %v270, 0
    %v283 = vsel %vm272, %v271, 0
    %285 = vmatprep.subr.bf16.mxu0 0
    %286 = vmatpush1.bf16.msra.mxu0 %v250
    %287 = vmatprep.subr.bf16.mxu0 0
    %288 = vmatpush1.bf16.msra.mxu0 0
    %289 = vmatprep.subr.bf16.mxu0 0
    %290 = vmatpush1.bf16.msra.mxu0 0
    %291 = vmatprep.subr.bf16.mxu0 0
    %292 = vmatpush1.bf16.msra.mxu0 0
    %293 = vmatprep.subr.bf16.mxu0 0
    %294 = vmatpush1.bf16.msra.mxu0 0
    %295 = vmatprep.subr.bf16.mxu0 0
    %296 = vmatpush1.bf16.msra.mxu0 0
    %297 = vmatprep.subr.bf16.mxu0 0
    %298 = vmatpush1.bf16.msra.mxu0 0
    %299 = vmatprep.subr.bf16.mxu0 0
    %300 = vmatpush1.bf16.msra.mxu0 0
    %301 = vmatprep.subr.bf16.mxu0 0
    %302 = vmatpush1.bf16.msra.mxu0 0
    %303 = vmatprep.subr.bf16.mxu0 0
    %304 = vmatpush1.bf16.msra.mxu0 0
    %305 = vmatprep.subr.bf16.mxu0 0
    %306 = vmatpush1.bf16.msra.mxu0 0
    %307 = vmatprep.subr.bf16.mxu0 0
    %308 = vmatpush1.bf16.msra.mxu0 0
    %309 = vmatprep.subr.bf16.mxu0 0
    %310 = vmatpush1.bf16.msra.mxu0 0
    %311 = vmatprep.subr.bf16.mxu0 0
    %312 = vmatpush1.bf16.msra.mxu0 0
    %313 = vmatprep.subr.bf16.mxu0 0
    %314 = vmatpush1.bf16.msra.mxu0 0
    %315 = vmatprep.subr.bf16.mxu0 0
    %316 = vmatpush1.bf16.msra.mxu0 0
    %317 = vmatprep.mubr.bf16.mxu0 0
    %318 = vmatmul.mubr.bf16.gmra.mrb[0].mxu0 %v274
    %v319 = vpop.f32.mrb[0].mxu0
    %v320 = vadd.f32 0.0, %v319
    %v321 = vpop.f32.mrb[0].mxu0
    %v322 = vpop.f32.mrb[0].mxu0
    %v323 = vadd.f32 0.0, %v322
    %v324 = vpop.f32.mrb[0].mxu0
    %325 = vmatprep.mubr.bf16.mxu0 0
    %326 = vmatmul.mubr.bf16.gmra.mrb[0].mxu0 %v277
    %v327 = vpop.f32.mrb[0].mxu0
    %v328 = vadd.f32 0.0, %v327
    %v329 = vpop.f32.mrb[0].mxu0
    %v330 = vpop.f32.mrb[0].mxu0
    %v331 = vadd.f32 0.0, %v330
    %v332 = vpop.f32.mrb[0].mxu0
    %333 = vmatprep.mubr.bf16.mxu0 0
    %334 = vmatmul.mubr.bf16.gmra.mrb[0].mxu0 %v280
    %v335 = vpop.f32.mrb[0].mxu0
    %v336 = vadd.f32 0.0, %v335
    %v337 = vpop.f32.mrb[0].mxu0
    %v338 = vpop.f32.mrb[0].mxu0
    %v339 = vadd.f32 0.0, %v338
    %v340 = vpop.f32.mrb[0].mxu0
    %341 = vmatprep.mubr.bf16.mxu0 0
    %342 = vmatmul.mubr.bf16.gmra.mrb[0].mxu0 %v283
    %v343 = vpop.f32.mrb[0].mxu0
    %v344 = vadd.f32 0.0, %v343
    %v345 = vpop.f32.mrb[0].mxu0
    %v346 = vpop.f32.mrb[0].mxu0
    %v347 = vadd.f32 0.0, %v346
    %v348 = vpop.f32.mrb[0].mxu0
    %349 = vdwg.mxu0
    %v350 = vadd.f32 %v165, %v320
    %v351 = vadd.f32 %v166, %v323
    %v352 = vxor.u32 %v350, 2147483648
    %v353 = vxor.u32 %v351, 2147483648
    %v354 = vmul.f32 %v352, 1.442695
    %v355 = vpow.pop %v354
    %v356 = vmul.f32 %v353, 1.442695
    %v357 = vpow.pop %v356
    %v358 = vadd.f32 %v355, 1.0
    %v359 = vadd.f32 %v357, 1.0
    %v360 = vrcp.pop %v358
    %v361 = vmul.f32 1.0, %v360
    %v362 = vrcp.pop %v359
    %v363 = vmul.f32 1.0, %v362
    %366 = vrot.lane.b32.xlu0 %v320, 32
    %v367 = vpop.permute.xlu0 %366
    %368 = vrot.lane.b32.xlu0 %v323, 32
    %v369 = vpop.permute.xlu0 %368
    %v372 = vmul.f32 %v361, %v367
    %v373 = vmul.f32 %v363, %v369
    %v374 = vadd.f32 %v320, %v328
    %v375 = vadd.f32 %v323, %v331
    %v376 = vadd.f32 %v165, %v328
    %v377 = vadd.f32 %v166, %v331
    %v378 = vxor.u32 %v376, 2147483648
    %v379 = vxor.u32 %v377, 2147483648
    %v380 = vmul.f32 %v378, 1.442695
    %v381 = vpow.pop %v380
    %v382 = vmul.f32 %v379, 1.442695
    %v383 = vpow.pop %v382
    %v384 = vadd.f32 %v381, 1.0
    %v385 = vadd.f32 %v383, 1.0
    %v386 = vrcp.pop %v384
    %v387 = vmul.f32 1.0, %v386
    %v388 = vrcp.pop %v385
    %v389 = vmul.f32 1.0, %v388
    %392 = vrot.lane.b32.xlu0 %v328, 32
    %v393 = vpop.permute.xlu0 %392
    %394 = vrot.lane.b32.xlu0 %v331, 32
    %v395 = vpop.permute.xlu0 %394
    %v398 = vmul.f32 %v387, %v393
    %v399 = vmul.f32 %v389, %v395
    %v400 = vadd.f32 %v372, %v398
    %v401 = vadd.f32 %v373, %v399
    %v402 = vadd.f32 %v374, %v336
    %v403 = vadd.f32 %v375, %v339
    %v404 = vadd.f32 %v165, %v336
    %v405 = vadd.f32 %v166, %v339
    %v406 = vxor.u32 %v404, 2147483648
    %v407 = vxor.u32 %v405, 2147483648
    %v408 = vmul.f32 %v406, 1.442695
    %v409 = vpow.pop %v408
    %v410 = vmul.f32 %v407, 1.442695
    %v411 = vpow.pop %v410
    %v412 = vadd.f32 %v409, 1.0
    %v413 = vadd.f32 %v411, 1.0
    %v414 = vrcp.pop %v412
    %v415 = vmul.f32 1.0, %v414
    %v416 = vrcp.pop %v413
    %v417 = vmul.f32 1.0, %v416
    %420 = vrot.lane.b32.xlu0 %v336, 32
    %v421 = vpop.permute.xlu0 %420
    %422 = vrot.lane.b32.xlu0 %v339, 32
    %v423 = vpop.permute.xlu0 %422
    %v426 = vmul.f32 %v415, %v421
    %v427 = vmul.f32 %v417, %v423
    %v428 = vadd.f32 %v400, %v426
    %v429 = vadd.f32 %v401, %v427
    %v430 = vadd.f32 %v402, %v344
    %v431 = vadd.f32 %v403, %v347
    %v432 = vadd.f32 %v165, %v344
    %v433 = vadd.f32 %v166, %v347
    %v434 = vxor.u32 %v432, 2147483648
    %v435 = vxor.u32 %v433, 2147483648
    %v436 = vmul.f32 %v434, 1.442695
    %v437 = vpow.pop %v436
    %v438 = vmul.f32 %v435, 1.442695
    %v439 = vpow.pop %v438
    %v440 = vadd.f32 %v437, 1.0
    %v441 = vadd.f32 %v439, 1.0
    %v442 = vrcp.pop %v440
    %v443 = vmul.f32 1.0, %v442
    %v444 = vrcp.pop %v441
    %v445 = vmul.f32 1.0, %v444
    %448 = vrot.lane.b32.xlu0 %v344, 32
    %v449 = vpop.permute.xlu0 %448
    %450 = vrot.lane.b32.xlu0 %v347, 32
    %v451 = vpop.permute.xlu0 %450
    %v454 = vmul.f32 %v443, %v449
    %v455 = vmul.f32 %v445, %v451
    %v456 = vadd.f32 %v428, %v454
    %v457 = vadd.f32 %v429, %v455
    %460 = vrot.lane.b32.xlu0 %v430, 64
    %v461 = vpop.permute.xlu0 %460
    %462 = vrot.lane.b32.xlu0 %v431, 64
    %v463 = vpop.permute.xlu0 %462
    %v466 = vadd.f32 %v155, %v461
    %v467 = vadd.f32 %v156, %v463
    %v468 = vxor.u32 %v466, 2147483648
    %v469 = vxor.u32 %v467, 2147483648
    %v470 = vmul.f32 %v468, 1.442695
    %v471 = vpow.pop %v470
    %v472 = vmul.f32 %v469, 1.442695
    %v473 = vpow.pop %v472
    %v474 = vadd.f32 %v471, 1.0
    %v475 = vadd.f32 %v473, 1.0
    %v476 = vrcp.pop %v474
    %v477 = vmul.f32 1.0, %v476
    %v478 = vrcp.pop %v475
    %v479 = vmul.f32 1.0, %v478
    %v480 = vpack.c.bf16 %v457, %v456
    %482 = vrot.lane.b32.xlu0 %v480, 96
    %v483 = vpop.permute.xlu0 %482
    %v488 = vunpack.c.l.b16 %v80
    %v489 = vunpack.c.l.b16 %v81
    %v490 = vunpack.c.l.b16 %v82
    %v491 = vunpack.c.l.b16 %v83
    %v492 = vpack.c.b16 %v489, %v488
    %v493 = vpack.c.b16 %v491, %v490
    %v497 = vsel %vm104, %v483, 0
    %499 = vmatprep.subr.bf16.mxu0 0
    %500 = vmatpush1.bf16.msra.mxu0 %v492
    %501 = vmatprep.subr.bf16.mxu0 0
    %502 = vmatpush1.bf16.msra.mxu0 %v493
    %503 = vmatprep.subr.bf16.mxu0 0
    %504 = vmatpush1.bf16.msra.mxu0 0
    %505 = vmatprep.subr.bf16.mxu0 0
    %506 = vmatpush1.bf16.msra.mxu0 0
    %507 = vmatprep.subr.bf16.mxu0 0
    %508 = vmatpush1.bf16.msra.mxu0 0
    %509 = vmatprep.subr.bf16.mxu0 0
    %510 = vmatpush1.bf16.msra.mxu0 0
    %511 = vmatprep.subr.bf16.mxu0 0
    %512 = vmatpush1.bf16.msra.mxu0 0
    %513 = vmatprep.subr.bf16.mxu0 0
    %514 = vmatpush1.bf16.msra.mxu0 0
    %515 = vmatprep.subr.bf16.mxu0 0
    %516 = vmatpush1.bf16.msra.mxu0 0
    %517 = vmatprep.subr.bf16.mxu0 0
    %518 = vmatpush1.bf16.msra.mxu0 0
    %519 = vmatprep.subr.bf16.mxu0 0
    %520 = vmatpush1.bf16.msra.mxu0 0
    %521 = vmatprep.subr.bf16.mxu0 0
    %522 = vmatpush1.bf16.msra.mxu0 0
    %523 = vmatprep.subr.bf16.mxu0 0
    %524 = vmatpush1.bf16.msra.mxu0 0
    %525 = vmatprep.subr.bf16.mxu0 0
    %526 = vmatpush1.bf16.msra.mxu0 0
    %527 = vmatprep.subr.bf16.mxu0 0
    %528 = vmatpush1.bf16.msra.mxu0 0
    %529 = vmatprep.subr.bf16.mxu0 0
    %530 = vmatpush1.bf16.msra.mxu0 0
    %531 = vmatprep.mubr.bf16.mxu0 0
    %532 = vmatmul.mubr.bf16.gmra.mrb[0].mxu0 %v497
    %v533 = vpop.f32.mrb[0].mxu0
    %v534 = vadd.f32 0.0, %v533
    %v535 = vpop.f32.mrb[0].mxu0
    %v536 = vpop.f32.mrb[0].mxu0
    %v537 = vadd.f32 0.0, %v536
    %v538 = vpop.f32.mrb[0].mxu0
    %539 = vdwg.mxu0
    %542 = vrot.lane.b32.xlu0 %v534, 64
    %v543 = vpop.permute.xlu0 %542
    %544 = vrot.lane.b32.xlu0 %v537, 64
    %v545 = vpop.permute.xlu0 %544
    %v548 = vadd.f32 %v175, %v543
    %v549 = vadd.f32 %v176, %v545
    %v550 = vtanh.pop %v548
    %v551 = vtanh.pop %v549
    %v552 = vsub.f32 1.0, %v477
    %v553 = vsub.f32 1.0, %v479
    %v554 = vmul.f32 %v552, %v430
    %v555 = vmul.f32 %v553, %v431
    %558 = vrot.lane.b32.xlu0 %v550, 64
    %v559 = vpop.permute.xlu0 %558
    %560 = vrot.lane.b32.xlu0 %v551, 64
    %v561 = vpop.permute.xlu0 %560
    %v564 = vmul.f32 %v477, %v559
    %v565 = vmul.f32 %v479, %v561
    %v566 = vadd.f32 %v554, %v564
    %v567 = vadd.f32 %v555, %v565
    %v568 = vmul.f32 %v566, %v184
    %v569 = vmul.f32 %v567, %v185
    %v570 = vpack.c.bf16 %v569, %v568
    %v572 = vsel %vm104, %v570, 0
    %574 = vmatprep.subr.bf16.mxu0 0
    %575 = vmatpush1.bf16.msra.mxu0 %v197
    %576 = vmatprep.subr.bf16.mxu0 0
    %577 = vmatpush1.bf16.msra.mxu0 %v198
    %578 = vmatprep.subr.bf16.mxu0 0
    %579 = vmatpush1.bf16.msra.mxu0 0
    %580 = vmatprep.subr.bf16.mxu0 0
    %581 = vmatpush1.bf16.msra.mxu0 0
    %582 = vmatprep.subr.bf16.mxu0 0
    %583 = vmatpush1.bf16.msra.mxu0 0
    %584 = vmatprep.subr.bf16.mxu0 0
    %585 = vmatpush1.bf16.msra.mxu0 0
    %586 = vmatprep.subr.bf16.mxu0 0
    %587 = vmatpush1.bf16.msra.mxu0 0
    %588 = vmatprep.subr.bf16.mxu0 0
    %589 = vmatpush1.bf16.msra.mxu0 0
    %590 = vmatprep.subr.bf16.mxu0 0
    %591 = vmatpush1.bf16.msra.mxu0 0
    %592 = vmatprep.subr.bf16.mxu0 0
    %593 = vmatpush1.bf16.msra.mxu0 0
    %594 = vmatprep.subr.bf16.mxu0 0
    %595 = vmatpush1.bf16.msra.mxu0 0
    %596 = vmatprep.subr.bf16.mxu0 0
    %597 = vmatpush1.bf16.msra.mxu0 0
    %598 = vmatprep.subr.bf16.mxu0 0
    %599 = vmatpush1.bf16.msra.mxu0 0
    %600 = vmatprep.subr.bf16.mxu0 0
    %601 = vmatpush1.bf16.msra.mxu0 0
    %602 = vmatprep.subr.bf16.mxu0 0
    %603 = vmatpush1.bf16.msra.mxu0 0
    %604 = vmatprep.subr.bf16.mxu0 0
    %605 = vmatpush1.bf16.msra.mxu0 0
    %606 = vmatprep.mubr.bf16.mxu0 0
    %607 = vmatmul.mubr.bf16.gmra.mrb[0].mxu0 %v572
    %v608 = vpop.f32.mrb[0].mxu0
    %v609 = vadd.f32 0.0, %v608
    %v610 = vpop.f32.mrb[0].mxu0
    %v611 = vpop.f32.mrb[0].mxu0
    %v612 = vadd.f32 0.0, %v611
    %v613 = vpop.f32.mrb[0].mxu0
    %614 = vdwg.mxu0
    %v615 = vpack.c.bf16 %v612, %v609
    %617 = vrot.lane.b32.xlu0 %v615, 32
    %v618 = vpop.permute.xlu0 %617
    %v620 = vsel %vm104, %v570, %v618
    %622 = vmatprep.subr.bf16.mxu0 0
    %623 = vmatpush1.bf16.msra.mxu0 %v620
    %624 = vmatprep.subr.bf16.mxu0 0
    %625 = vmatpush1.bf16.msra.mxu0 0
    %626 = vmatprep.subr.bf16.mxu0 0
    %627 = vmatpush1.bf16.msra.mxu0 0
    %628 = vmatprep.subr.bf16.mxu0 0
    %629 = vmatpush1.bf16.msra.mxu0 0
    %630 = vmatprep.subr.bf16.mxu0 0
    %631 = vmatpush1.bf16.msra.mxu0 0
    %632 = vmatprep.subr.bf16.mxu0 0
    %633 = vmatpush1.bf16.msra.mxu0 0
    %634 = vmatprep.subr.bf16.mxu0 0
    %635 = vmatpush1.bf16.msra.mxu0 0
    %636 = vmatprep.subr.bf16.mxu0 0
    %637 = vmatpush1.bf16.msra.mxu0 0
    %638 = vmatprep.subr.bf16.mxu0 0
    %639 = vmatpush1.bf16.msra.mxu0 0
    %640 = vmatprep.subr.bf16.mxu0 0
    %641 = vmatpush1.bf16.msra.mxu0 0
    %642 = vmatprep.subr.bf16.mxu0 0
    %643 = vmatpush1.bf16.msra.mxu0 0
    %644 = vmatprep.subr.bf16.mxu0 0
    %645 = vmatpush1.bf16.msra.mxu0 0
    %646 = vmatprep.subr.bf16.mxu0 0
    %647 = vmatpush1.bf16.msra.mxu0 0
    %648 = vmatprep.subr.bf16.mxu0 0
    %649 = vmatpush1.bf16.msra.mxu0 0
    %650 = vmatprep.subr.bf16.mxu0 0
    %651 = vmatpush1.bf16.msra.mxu0 0
    %652 = vmatprep.subr.bf16.mxu0 0
    %653 = vmatpush1.bf16.msra.mxu0 0
    %654 = vmatprep.mubr.bf16.mxu0 0
    %655 = vmatmul.mubr.bf16.gmra.mrb[0].mxu0 %v274
    %v656 = vpop.f32.mrb[0].mxu0
    %v657 = vadd.f32 0.0, %v656
    %v658 = vpop.f32.mrb[0].mxu0
    %v659 = vpop.f32.mrb[0].mxu0
    %v660 = vadd.f32 0.0, %v659
    %v661 = vpop.f32.mrb[0].mxu0
    %662 = vmatprep.mubr.bf16.mxu0 0
    %663 = vmatmul.mubr.bf16.gmra.mrb[0].mxu0 %v277
    %v664 = vpop.f32.mrb[0].mxu0
    %v665 = vadd.f32 0.0, %v664
    %v666 = vpop.f32.mrb[0].mxu0
    %v667 = vpop.f32.mrb[0].mxu0
    %v668 = vadd.f32 0.0, %v667
    %v669 = vpop.f32.mrb[0].mxu0
    %670 = vmatprep.mubr.bf16.mxu0 0
    %671 = vmatmul.mubr.bf16.gmra.mrb[0].mxu0 %v280
    %v672 = vpop.f32.mrb[0].mxu0
    %v673 = vadd.f32 0.0, %v672
    %v674 = vpop.f32.mrb[0].mxu0
    %v675 = vpop.f32.mrb[0].mxu0
    %v676 = vadd.f32 0.0, %v675
    %v677 = vpop.f32.mrb[0].mxu0
    %678 = vmatprep.mubr.bf16.mxu0 0
    %679 = vmatmul.mubr.bf16.gmra.mrb[0].mxu0 %v283
    %v680 = vpop.f32.mrb[0].mxu0
    %v681 = vadd.f32 0.0, %v680
    %v682 = vpop.f32.mrb[0].mxu0
    %v683 = vpop.f32.mrb[0].mxu0
    %v684 = vadd.f32 0.0, %v683
    %v685 = vpop.f32.mrb[0].mxu0
    %686 = vdwg.mxu0
    %v687 = vadd.f32 %v165, %v657
    %v688 = vadd.f32 %v166, %v660
    %v689 = vxor.u32 %v687, 2147483648
    %v690 = vxor.u32 %v688, 2147483648
    %v691 = vmul.f32 %v689, 1.442695
    %v692 = vpow.pop %v691
    %v693 = vmul.f32 %v690, 1.442695
    %v694 = vpow.pop %v693
    %v695 = vadd.f32 %v692, 1.0
    %v696 = vadd.f32 %v694, 1.0
    %v697 = vrcp.pop %v695
    %v698 = vmul.f32 1.0, %v697
    %v699 = vrcp.pop %v696
    %v700 = vmul.f32 1.0, %v699
    %703 = vrot.lane.b32.xlu0 %v657, 32
    %v704 = vpop.permute.xlu0 %703
    %705 = vrot.lane.b32.xlu0 %v660, 32
    %v706 = vpop.permute.xlu0 %705
    %v709 = vmul.f32 %v698, %v704
    %v710 = vmul.f32 %v700, %v706
    %v711 = vadd.f32 %v657, %v665
    %v712 = vadd.f32 %v660, %v668
    %v713 = vadd.f32 %v165, %v665
    %v714 = vadd.f32 %v166, %v668
    %v715 = vxor.u32 %v713, 2147483648
    %v716 = vxor.u32 %v714, 2147483648
    %v717 = vmul.f32 %v715, 1.442695
    %v718 = vpow.pop %v717
    %v719 = vmul.f32 %v716, 1.442695
    %v720 = vpow.pop %v719
    %v721 = vadd.f32 %v718, 1.0
    %v722 = vadd.f32 %v720, 1.0
    %v723 = vrcp.pop %v721
    %v724 = vmul.f32 1.0, %v723
    %v725 = vrcp.pop %v722
    %v726 = vmul.f32 1.0, %v725
    %729 = vrot.lane.b32.xlu0 %v665, 32
    %v730 = vpop.permute.xlu0 %729
    %731 = vrot.lane.b32.xlu0 %v668, 32
    %v732 = vpop.permute.xlu0 %731
    %v735 = vmul.f32 %v724, %v730
    %v736 = vmul.f32 %v726, %v732
    %v737 = vadd.f32 %v709, %v735
    %v738 = vadd.f32 %v710, %v736
    %v739 = vadd.f32 %v711, %v673
    %v740 = vadd.f32 %v712, %v676
    %v741 = vadd.f32 %v165, %v673
    %v742 = vadd.f32 %v166, %v676
    %v743 = vxor.u32 %v741, 2147483648
    %v744 = vxor.u32 %v742, 2147483648
    %v745 = vmul.f32 %v743, 1.442695
    %v746 = vpow.pop %v745
    %v747 = vmul.f32 %v744, 1.442695
    %v748 = vpow.pop %v747
    %v749 = vadd.f32 %v746, 1.0
    %v750 = vadd.f32 %v748, 1.0
    %v751 = vrcp.pop %v749
    %v752 = vmul.f32 1.0, %v751
    %v753 = vrcp.pop %v750
    %v754 = vmul.f32 1.0, %v753
    %757 = vrot.lane.b32.xlu0 %v673, 32
    %v758 = vpop.permute.xlu0 %757
    %759 = vrot.lane.b32.xlu0 %v676, 32
    %v760 = vpop.permute.xlu0 %759
    %v763 = vmul.f32 %v752, %v758
    %v764 = vmul.f32 %v754, %v760
    %v765 = vadd.f32 %v737, %v763
    %v766 = vadd.f32 %v738, %v764
    %v767 = vadd.f32 %v739, %v681
    %v768 = vadd.f32 %v740, %v684
    %v769 = vadd.f32 %v165, %v681
    %v770 = vadd.f32 %v166, %v684
    %v771 = vxor.u32 %v769, 2147483648
    %v772 = vxor.u32 %v770, 2147483648
    %v773 = vmul.f32 %v771, 1.442695
    %v774 = vpow.pop %v773
    %v775 = vmul.f32 %v772, 1.442695
    %v776 = vpow.pop %v775
    %v777 = vadd.f32 %v774, 1.0
    %v778 = vadd.f32 %v776, 1.0
    %v779 = vrcp.pop %v777
    %v780 = vmul.f32 1.0, %v779
    %v781 = vrcp.pop %v778
    %v782 = vmul.f32 1.0, %v781
    %785 = vrot.lane.b32.xlu0 %v681, 32
    %v786 = vpop.permute.xlu0 %785
    %787 = vrot.lane.b32.xlu0 %v684, 32
    %v788 = vpop.permute.xlu0 %787
    %v791 = vmul.f32 %v780, %v786
    %v792 = vmul.f32 %v782, %v788
    %v793 = vadd.f32 %v765, %v791
    %v794 = vadd.f32 %v766, %v792
    %797 = vrot.lane.b32.xlu0 %v767, 64
    %v798 = vpop.permute.xlu0 %797
    %799 = vrot.lane.b32.xlu0 %v768, 64
    %v800 = vpop.permute.xlu0 %799
    %v803 = vadd.f32 %v155, %v798
    %v804 = vadd.f32 %v156, %v800
    %v805 = vxor.u32 %v803, 2147483648
    %v806 = vxor.u32 %v804, 2147483648
    %v807 = vmul.f32 %v805, 1.442695
    %v808 = vpow.pop %v807
    %v809 = vmul.f32 %v806, 1.442695
    %v810 = vpow.pop %v809
    %v811 = vadd.f32 %v808, 1.0
    %v812 = vadd.f32 %v810, 1.0
    %v813 = vrcp.pop %v811
    %v814 = vmul.f32 1.0, %v813
    %v815 = vrcp.pop %v812
    %v816 = vmul.f32 1.0, %v815
    %v817 = vpack.c.bf16 %v794, %v793
    %819 = vrot.lane.b32.xlu0 %v817, 96
    %v820 = vpop.permute.xlu0 %819
    %v822 = vsel %vm104, %v820, 0
    %824 = vmatprep.subr.bf16.mxu0 0
    %825 = vmatpush1.bf16.msra.mxu0 %v492
    %826 = vmatprep.subr.bf16.mxu0 0
    %827 = vmatpush1.bf16.msra.mxu0 %v493
    %828 = vmatprep.subr.bf16.mxu0 0
    %829 = vmatpush1.bf16.msra.mxu0 0
    %830 = vmatprep.subr.bf16.mxu0 0
    %831 = vmatpush1.bf16.msra.mxu0 0
    %832 = vmatprep.subr.bf16.mxu0 0
    %833 = vmatpush1.bf16.msra.mxu0 0
    %834 = vmatprep.subr.bf16.mxu0 0
    %835 = vmatpush1.bf16.msra.mxu0 0
    %836 = vmatprep.subr.bf16.mxu0 0
    %837 = vmatpush1.bf16.msra.mxu0 0
    %838 = vmatprep.subr.bf16.mxu0 0
    %839 = vmatpush1.bf16.msra.mxu0 0
    %840 = vmatprep.subr.bf16.mxu0 0
    %841 = vmatpush1.bf16.msra.mxu0 0
    %842 = vmatprep.subr.bf16.mxu0 0
    %843 = vmatpush1.bf16.msra.mxu0 0
    %844 = vmatprep.subr.bf16.mxu0 0
    %845 = vmatpush1.bf16.msra.mxu0 0
    %846 = vmatprep.subr.bf16.mxu0 0
    %847 = vmatpush1.bf16.msra.mxu0 0
    %848 = vmatprep.subr.bf16.mxu0 0
    %849 = vmatpush1.bf16.msra.mxu0 0
    %850 = vmatprep.subr.bf16.mxu0 0
    %851 = vmatpush1.bf16.msra.mxu0 0
    %852 = vmatprep.subr.bf16.mxu0 0
    %853 = vmatpush1.bf16.msra.mxu0 0
    %854 = vmatprep.subr.bf16.mxu0 0
    %855 = vmatpush1.bf16.msra.mxu0 0
    %856 = vmatprep.mubr.bf16.mxu0 0
    %857 = vmatmul.mubr.bf16.gmra.mrb[0].mxu0 %v822
    %v858 = vpop.f32.mrb[0].mxu0
    %v859 = vadd.f32 0.0, %v858
    %v860 = vpop.f32.mrb[0].mxu0
    %v861 = vpop.f32.mrb[0].mxu0
    %v862 = vadd.f32 0.0, %v861
    %v863 = vpop.f32.mrb[0].mxu0
    %864 = vdwg.mxu0
    %867 = vrot.lane.b32.xlu0 %v859, 64
    %v868 = vpop.permute.xlu0 %867
    %869 = vrot.lane.b32.xlu0 %v862, 64
    %v870 = vpop.permute.xlu0 %869
    %v873 = vadd.f32 %v175, %v868
    %v874 = vadd.f32 %v176, %v870
    %v875 = vtanh.pop %v873
    %v876 = vtanh.pop %v874
    %v877 = vsub.f32 1.0, %v814
    %v878 = vsub.f32 1.0, %v816
    %v879 = vmul.f32 %v877, %v767
    %v880 = vmul.f32 %v878, %v768
    %883 = vrot.lane.b32.xlu0 %v875, 64
    %v884 = vpop.permute.xlu0 %883
    %885 = vrot.lane.b32.xlu0 %v876, 64
    %v886 = vpop.permute.xlu0 %885
    %v889 = vmul.f32 %v814, %v884
    %v890 = vmul.f32 %v816, %v886
    %v891 = vadd.f32 %v879, %v889
    %v892 = vadd.f32 %v880, %v890
    %v893 = vmul.f32 %v891, %v184
    %v894 = vmul.f32 %v892, %v185
    %v895 = vpack.c.bf16 %v894, %v893
    %v897 = vsel %vm104, %v895, 0
    %899 = vmatprep.subr.bf16.mxu0 0
    %900 = vmatpush1.bf16.msra.mxu0 %v197
    %901 = vmatprep.subr.bf16.mxu0 0
    %902 = vmatpush1.bf16.msra.mxu0 %v198
    %903 = vmatprep.subr.bf16.mxu0 0
    %904 = vmatpush1.bf16.msra.mxu0 0
    %905 = vmatprep.subr.bf16.mxu0 0
    %906 = vmatpush1.bf16.msra.mxu0 0
    %907 = vmatprep.subr.bf16.mxu0 0
    %908 = vmatpush1.bf16.msra.mxu0 0
    %909 = vmatprep.subr.bf16.mxu0 0
    %910 = vmatpush1.bf16.msra.mxu0 0
    %911 = vmatprep.subr.bf16.mxu0 0
    %912 = vmatpush1.bf16.msra.mxu0 0
    %913 = vmatprep.subr.bf16.mxu0 0
    %914 = vmatpush1.bf16.msra.mxu0 0
    %915 = vmatprep.subr.bf16.mxu0 0
    %916 = vmatpush1.bf16.msra.mxu0 0
    %917 = vmatprep.subr.bf16.mxu0 0
    %918 = vmatpush1.bf16.msra.mxu0 0
    %919 = vmatprep.subr.bf16.mxu0 0
    %920 = vmatpush1.bf16.msra.mxu0 0
    %921 = vmatprep.subr.bf16.mxu0 0
    %922 = vmatpush1.bf16.msra.mxu0 0
    %923 = vmatprep.subr.bf16.mxu0 0
    %924 = vmatpush1.bf16.msra.mxu0 0
    %925 = vmatprep.subr.bf16.mxu0 0
    %926 = vmatpush1.bf16.msra.mxu0 0
    %927 = vmatprep.subr.bf16.mxu0 0
    %928 = vmatpush1.bf16.msra.mxu0 0
    %929 = vmatprep.subr.bf16.mxu0 0
    %930 = vmatpush1.bf16.msra.mxu0 0
    %931 = vmatprep.mubr.bf16.mxu0 0
    %932 = vmatmul.mubr.bf16.gmra.mrb[0].mxu0 %v897
    %v933 = vpop.f32.mrb[0].mxu0
    %v934 = vadd.f32 0.0, %v933
    %v935 = vpop.f32.mrb[0].mxu0
    %v936 = vpop.f32.mrb[0].mxu0
    %v937 = vadd.f32 0.0, %v936
    %v938 = vpop.f32.mrb[0].mxu0
    %939 = vdwg.mxu0
    %v940 = vpack.c.bf16 %v937, %v934
    %942 = vrot.lane.b32.xlu0 %v940, 32
    %v943 = vpop.permute.xlu0 %942
    %v945 = vsel %vm104, %v895, %v943
    %947 = vmatprep.subr.bf16.mxu0 0
    %948 = vmatpush1.bf16.msra.mxu0 %v945
    %949 = vmatprep.subr.bf16.mxu0 0
    %950 = vmatpush1.bf16.msra.mxu0 0
    %951 = vmatprep.subr.bf16.mxu0 0
    %952 = vmatpush1.bf16.msra.mxu0 0
    %953 = vmatprep.subr.bf16.mxu0 0
    %954 = vmatpush1.bf16.msra.mxu0 0
    %955 = vmatprep.subr.bf16.mxu0 0
    %956 = vmatpush1.bf16.msra.mxu0 0
    %957 = vmatprep.subr.bf16.mxu0 0
    %958 = vmatpush1.bf16.msra.mxu0 0
    %959 = vmatprep.subr.bf16.mxu0 0
    %960 = vmatpush1.bf16.msra.mxu0 0
    %961 = vmatprep.subr.bf16.mxu0 0
    %962 = vmatpush1.bf16.msra.mxu0 0
    %963 = vmatprep.subr.bf16.mxu0 0
    %964 = vmatpush1.bf16.msra.mxu0 0
    %965 = vmatprep.subr.bf16.mxu0 0
    %966 = vmatpush1.bf16.msra.mxu0 0
    %967 = vmatprep.subr.bf16.mxu0 0
    %968 = vmatpush1.bf16.msra.mxu0 0
    %969 = vmatprep.subr.bf16.mxu0 0
    %970 = vmatpush1.bf16.msra.mxu0 0
    %971 = vmatprep.subr.bf16.mxu0 0
    %972 = vmatpush1.bf16.msra.mxu0 0
    %973 = vmatprep.subr.bf16.mxu0 0
    %974 = vmatpush1.bf16.msra.mxu0 0
    %975 = vmatprep.subr.bf16.mxu0 0
    %976 = vmatpush1.bf16.msra.mxu0 0
    %977 = vmatprep.subr.bf16.mxu0 0
    %978 = vmatpush1.bf16.msra.mxu0 0
    %979 = vmatprep.mubr.bf16.mxu0 0
    %980 = vmatmul.mubr.bf16.gmra.mrb[0].mxu0 %v274
    %v981 = vpop.f32.mrb[0].mxu0
    %v982 = vadd.f32 0.0, %v981
    %v983 = vpop.f32.mrb[0].mxu0
    %v984 = vpop.f32.mrb[0].mxu0
    %v985 = vadd.f32 0.0, %v984
    %v986 = vpop.f32.mrb[0].mxu0
    %987 = vmatprep.mubr.bf16.mxu0 0
    %988 = vmatmul.mubr.bf16.gmra.mrb[0].mxu0 %v277
    %v989 = vpop.f32.mrb[0].mxu0
    %v990 = vadd.f32 0.0, %v989
    %v991 = vpop.f32.mrb[0].mxu0
    %v992 = vpop.f32.mrb[0].mxu0
    %v993 = vadd.f32 0.0, %v992
    %v994 = vpop.f32.mrb[0].mxu0
    %995 = vmatprep.mubr.bf16.mxu0 0
    %996 = vmatmul.mubr.bf16.gmra.mrb[0].mxu0 %v280
    %v997 = vpop.f32.mrb[0].mxu0
    %v998 = vadd.f32 0.0, %v997
    %v999 = vpop.f32.mrb[0].mxu0
    %v1000 = vpop.f32.mrb[0].mxu0
    %v1001 = vadd.f32 0.0, %v1000
    %v1002 = vpop.f32.mrb[0].mxu0
    %1003 = vmatprep.mubr.bf16.mxu0 0
    %1004 = vmatmul.mubr.bf16.gmra.mrb[0].mxu0 %v283
    %v1005 = vpop.f32.mrb[0].mxu0
    %v1006 = vadd.f32 0.0, %v1005
    %v1007 = vpop.f32.mrb[0].mxu0
    %v1008 = vpop.f32.mrb[0].mxu0
    %v1009 = vadd.f32 0.0, %v1008
    %v1010 = vpop.f32.mrb[0].mxu0
    %1011 = vdwg.mxu0
    %v1012 = vadd.f32 %v165, %v982
    %v1013 = vadd.f32 %v166, %v985
    %v1014 = vxor.u32 %v1012, 2147483648
    %v1015 = vxor.u32 %v1013, 2147483648
    %v1016 = vmul.f32 %v1014, 1.442695
    %v1017 = vpow.pop %v1016
    %v1018 = vmul.f32 %v1015, 1.442695
    %v1019 = vpow.pop %v1018
    %v1020 = vadd.f32 %v1017, 1.0
    %v1021 = vadd.f32 %v1019, 1.0
    %v1022 = vrcp.pop %v1020
    %v1023 = vmul.f32 1.0, %v1022
    %v1024 = vrcp.pop %v1021
    %v1025 = vmul.f32 1.0, %v1024
    %1028 = vrot.lane.b32.xlu0 %v982, 32
    %v1029 = vpop.permute.xlu0 %1028
    %1030 = vrot.lane.b32.xlu0 %v985, 32
    %v1031 = vpop.permute.xlu0 %1030
    %v1034 = vmul.f32 %v1023, %v1029
    %v1035 = vmul.f32 %v1025, %v1031
    %v1036 = vadd.f32 %v982, %v990
    %v1037 = vadd.f32 %v985, %v993
    %v1038 = vadd.f32 %v165, %v990
    %v1039 = vadd.f32 %v166, %v993
    %v1040 = vxor.u32 %v1038, 2147483648
    %v1041 = vxor.u32 %v1039, 2147483648
    %v1042 = vmul.f32 %v1040, 1.442695
    %v1043 = vpow.pop %v1042
    %v1044 = vmul.f32 %v1041, 1.442695
    %v1045 = vpow.pop %v1044
    %v1046 = vadd.f32 %v1043, 1.0
    %v1047 = vadd.f32 %v1045, 1.0
    %v1048 = vrcp.pop %v1046
    %v1049 = vmul.f32 1.0, %v1048
    %v1050 = vrcp.pop %v1047
    %v1051 = vmul.f32 1.0, %v1050
    %1054 = vrot.lane.b32.xlu0 %v990, 32
    %v1055 = vpop.permute.xlu0 %1054
    %1056 = vrot.lane.b32.xlu0 %v993, 32
    %v1057 = vpop.permute.xlu0 %1056
    %v1060 = vmul.f32 %v1049, %v1055
    %v1061 = vmul.f32 %v1051, %v1057
    %v1062 = vadd.f32 %v1034, %v1060
    %v1063 = vadd.f32 %v1035, %v1061
    %v1064 = vadd.f32 %v1036, %v998
    %v1065 = vadd.f32 %v1037, %v1001
    %v1066 = vadd.f32 %v165, %v998
    %v1067 = vadd.f32 %v166, %v1001
    %v1068 = vxor.u32 %v1066, 2147483648
    %v1069 = vxor.u32 %v1067, 2147483648
    %v1070 = vmul.f32 %v1068, 1.442695
    %v1071 = vpow.pop %v1070
    %v1072 = vmul.f32 %v1069, 1.442695
    %v1073 = vpow.pop %v1072
    %v1074 = vadd.f32 %v1071, 1.0
    %v1075 = vadd.f32 %v1073, 1.0
    %v1076 = vrcp.pop %v1074
    %v1077 = vmul.f32 1.0, %v1076
    %v1078 = vrcp.pop %v1075
    %v1079 = vmul.f32 1.0, %v1078
    %1082 = vrot.lane.b32.xlu0 %v998, 32
    %v1083 = vpop.permute.xlu0 %1082
    %1084 = vrot.lane.b32.xlu0 %v1001, 32
    %v1085 = vpop.permute.xlu0 %1084
    %v1088 = vmul.f32 %v1077, %v1083
    %v1089 = vmul.f32 %v1079, %v1085
    %v1090 = vadd.f32 %v1062, %v1088
    %v1091 = vadd.f32 %v1063, %v1089
    %v1092 = vadd.f32 %v1064, %v1006
    %v1093 = vadd.f32 %v1065, %v1009
    %v1094 = vadd.f32 %v165, %v1006
    %v1095 = vadd.f32 %v166, %v1009
    %v1096 = vxor.u32 %v1094, 2147483648
    %v1097 = vxor.u32 %v1095, 2147483648
    %v1098 = vmul.f32 %v1096, 1.442695
    %v1099 = vpow.pop %v1098
    %v1100 = vmul.f32 %v1097, 1.442695
    %v1101 = vpow.pop %v1100
    %v1102 = vadd.f32 %v1099, 1.0
    %v1103 = vadd.f32 %v1101, 1.0
    %v1104 = vrcp.pop %v1102
    %v1105 = vmul.f32 1.0, %v1104
    %v1106 = vrcp.pop %v1103
    %v1107 = vmul.f32 1.0, %v1106
    %1110 = vrot.lane.b32.xlu0 %v1006, 32
    %v1111 = vpop.permute.xlu0 %1110
    %1112 = vrot.lane.b32.xlu0 %v1009, 32
    %v1113 = vpop.permute.xlu0 %1112
    %v1116 = vmul.f32 %v1105, %v1111
    %v1117 = vmul.f32 %v1107, %v1113
    %v1118 = vadd.f32 %v1090, %v1116
    %v1119 = vadd.f32 %v1091, %v1117
    %1122 = vrot.lane.b32.xlu0 %v1092, 64
    %v1123 = vpop.permute.xlu0 %1122
    %1124 = vrot.lane.b32.xlu0 %v1093, 64
    %v1125 = vpop.permute.xlu0 %1124
    %v1128 = vadd.f32 %v155, %v1123
    %v1129 = vadd.f32 %v156, %v1125
    %v1130 = vxor.u32 %v1128, 2147483648
    %v1131 = vxor.u32 %v1129, 2147483648
    %v1132 = vmul.f32 %v1130, 1.442695
    %v1133 = vpow.pop %v1132
    %v1134 = vmul.f32 %v1131, 1.442695
    %v1135 = vpow.pop %v1134
    %v1136 = vadd.f32 %v1133, 1.0
    %v1137 = vadd.f32 %v1135, 1.0
    %v1138 = vrcp.pop %v1136
    %v1139 = vmul.f32 1.0, %v1138
    %v1140 = vrcp.pop %v1137
    %v1141 = vmul.f32 1.0, %v1140
    %v1142 = vpack.c.bf16 %v1119, %v1118
    %1144 = vrot.lane.b32.xlu0 %v1142, 96
    %v1145 = vpop.permute.xlu0 %1144
    %v1147 = vsel %vm104, %v1145, 0
    %1149 = vmatprep.subr.bf16.mxu0 0
    %1150 = vmatpush1.bf16.msra.mxu0 %v492
    %1151 = vmatprep.subr.bf16.mxu0 0
    %1152 = vmatpush1.bf16.msra.mxu0 %v493
    %1153 = vmatprep.subr.bf16.mxu0 0
    %1154 = vmatpush1.bf16.msra.mxu0 0
    %1155 = vmatprep.subr.bf16.mxu0 0
    %1156 = vmatpush1.bf16.msra.mxu0 0
    %1157 = vmatprep.subr.bf16.mxu0 0
    %1158 = vmatpush1.bf16.msra.mxu0 0
    %1159 = vmatprep.subr.bf16.mxu0 0
    %1160 = vmatpush1.bf16.msra.mxu0 0
    %1161 = vmatprep.subr.bf16.mxu0 0
    %1162 = vmatpush1.bf16.msra.mxu0 0
    %1163 = vmatprep.subr.bf16.mxu0 0
    %1164 = vmatpush1.bf16.msra.mxu0 0
    %1165 = vmatprep.subr.bf16.mxu0 0
    %1166 = vmatpush1.bf16.msra.mxu0 0
    %1167 = vmatprep.subr.bf16.mxu0 0
    %1168 = vmatpush1.bf16.msra.mxu0 0
    %1169 = vmatprep.subr.bf16.mxu0 0
    %1170 = vmatpush1.bf16.msra.mxu0 0
    %1171 = vmatprep.subr.bf16.mxu0 0
    %1172 = vmatpush1.bf16.msra.mxu0 0
    %1173 = vmatprep.subr.bf16.mxu0 0
    %1174 = vmatpush1.bf16.msra.mxu0 0
    %1175 = vmatprep.subr.bf16.mxu0 0
    %1176 = vmatpush1.bf16.msra.mxu0 0
    %1177 = vmatprep.subr.bf16.mxu0 0
    %1178 = vmatpush1.bf16.msra.mxu0 0
    %1179 = vmatprep.subr.bf16.mxu0 0
    %1180 = vmatpush1.bf16.msra.mxu0 0
    %1181 = vmatprep.mubr.bf16.mxu0 0
    %1182 = vmatmul.mubr.bf16.gmra.mrb[0].mxu0 %v1147
    %v1183 = vpop.f32.mrb[0].mxu0
    %v1184 = vadd.f32 0.0, %v1183
    %v1185 = vpop.f32.mrb[0].mxu0
    %v1186 = vpop.f32.mrb[0].mxu0
    %v1187 = vadd.f32 0.0, %v1186
    %v1188 = vpop.f32.mrb[0].mxu0
    %1189 = vdwg.mxu0
    %1192 = vrot.lane.b32.xlu0 %v1184, 64
    %v1193 = vpop.permute.xlu0 %1192
    %1194 = vrot.lane.b32.xlu0 %v1187, 64
    %v1195 = vpop.permute.xlu0 %1194
    %v1198 = vadd.f32 %v175, %v1193
    %v1199 = vadd.f32 %v176, %v1195
    %v1200 = vtanh.pop %v1198
    %v1201 = vtanh.pop %v1199
    %v1202 = vsub.f32 1.0, %v1139
    %v1203 = vsub.f32 1.0, %v1141
    %v1204 = vmul.f32 %v1202, %v1092
    %v1205 = vmul.f32 %v1203, %v1093
    %1208 = vrot.lane.b32.xlu0 %v1200, 64
    %v1209 = vpop.permute.xlu0 %1208
    %1210 = vrot.lane.b32.xlu0 %v1201, 64
    %v1211 = vpop.permute.xlu0 %1210
    %v1214 = vmul.f32 %v1139, %v1209
    %v1215 = vmul.f32 %v1141, %v1211
    %v1216 = vadd.f32 %v1204, %v1214
    %v1217 = vadd.f32 %v1205, %v1215
    %v1218 = vmul.f32 %v1216, %v184
    %v1219 = vmul.f32 %v1217, %v185
    %1220 = vst.msk [vmem:[#allocation7] sm:$0xff] %vm104, %v1218
    %1221 = vst.msk [vmem:[#allocation7 + $0x8] sm:$0xff] %vm104, %v1219
    // Predicated region
    $region46: #{tpu_custom_call.1} parent=1 // pred_check
      _
    $region47: #{tpu_custom_call.1} parent=1 // pred_check_branch
      %1223 = sbr.rel (0) target = $region49
    $region48: #{tpu_custom_call.1} parent=1 // pred_region
      %s1225 = ssub.s32 256, 256
      %1226 = vsyncadd [#allocation4], %s1225
      %s1227 = sshll.u32 [#allocation7], 4
      %s1228 = int_to_ptr.vmem [resolvable:$true] %s1227
      %1233 = dma.vmem_to_hbm [thread:$0]  %s1228, 256, %s9, [#allocation4], 128, 128, 8
    $region49: #{tpu_custom_call.1} parent=1 // pred_fallthru
      _
    // Predicated region
    $region50: #{tpu_custom_call.1} parent=1 // pred_check
      _
    $region51: #{tpu_custom_call.1} parent=1 // pred_check_branch
      %1235 = sbr.rel (0) target = $region53
    $region52: #{tpu_custom_call.1} parent=1 // pred_region
      %1236 = dma.done [#allocation4], 256
    $region53: #{tpu_custom_call.1} parent=1 // pred_fallthru
      _
    %1237 = vsyncpa [#allocation3], 1
    %1238 = vsyncpa [#allocation6], 1
    %1239 = vsyncpa [#allocation4], 1

</llo_original>
